<compile_context>
chip_gen: v5e
topology: v5e:2x2
jax: 0.10.0
libtpu: 0.0.40
codegen_flags: <defaults>
</compile_context>

<pallas_src>
import math

import jax
import jax.numpy as jnp
import numpy as np
from jax.experimental import pallas as pl
from jax.experimental.pallas import tpu as pltpu

# ----------------------------- config ---------------------------------------
VOCAB = 64
SEQ = 8
HIDDEN = 32
FFN = 64
BATCH_Q = 2
GROUP_SIZE = 2                       # passages per query
BATCH_P = BATCH_Q * GROUP_SIZE
B_TOT = BATCH_Q + BATCH_P            # queries + passages encoded together
TOKENS = B_TOT * SEQ                 # flattened token rows for the projections

POOLING = "mean"                     # 'mean' or 'cls'
NORMALIZED = True
TEMPERATURE = 0.05
EPS = 1e-12
LN_EPS = 1e-5
SCALE = 1.0 / math.sqrt(HIDDEN)
NEG_INF = -1e9

# packed weight-slab column layout (rows = HIDDEN, dtype bf16)
C_QKV = 0                            # lanes [0, 3H)      : wq | wk | wv
C_WO = 3 * HIDDEN                    # lanes [3H, 4H)     : wo
C_W1 = 4 * HIDDEN                    # lanes [4H, 4H+FFN) : w1
C_W2T = 4 * HIDDEN + FFN             # lanes [.., +FFN)   : w2.T (pre-transposed)
W_COLS = 4 * HIDDEN + 2 * FFN        # = 256 lanes total

# lane-dense (OUT_ROWS, 128) output slab layout
OUT_LANES = 128
OUT_ROWS = 16
ROW_REPS = 0                         # rows [0, B_TOT)      : sentence reps (cols 0:HIDDEN)
ROW_SCORES = 8                       # rows [8, 8+BATCH_Q)  : scores (cols 0:BATCH_P)
ROW_LOSS = ROW_SCORES + BATCH_Q      # row 10               : loss (broadcast over lanes)


# ------------------------ shared math helpers --------------------------------
def _layer_norm(x, g, b):
    mu = jnp.mean(x, axis=-1, keepdims=True)
    var = jnp.mean(jnp.square(x - mu), axis=-1, keepdims=True)
    return (x - mu) * jax.lax.rsqrt(var + LN_EPS) * g + b


# ----------------------------- fused kernel ----------------------------------
def bi_encoder_kernel(x_ref, pk_ref, w_ref, ln_ref, out_ref):
    """Encoder (whole concatenated batch, single invocation) + pooling +
    L2-normalize + in-batch-negative similarity + mean cross-entropy loss."""
    x = x_ref[...]                                   # (TOKENS, H) bf16 (pre-cast)
    xf = x.astype(jnp.float32)                       # residual path in f32

    # --- fused QKV projection (one matmul over the lane-concatenated slab) ----
    qkv = jnp.dot(x, w_ref[:, C_QKV:C_WO],
                  preferred_element_type=jnp.float32)          # (TOKENS, 3H) f32
    q = qkv[:, 0:HIDDEN].astype(jnp.bfloat16).reshape(B_TOT, SEQ, HIDDEN)
    k = qkv[:, HIDDEN:2 * HIDDEN].astype(jnp.bfloat16).reshape(B_TOT, SEQ, HIDDEN)
    v = qkv[:, 2 * HIDDEN:3 * HIDDEN].astype(jnp.bfloat16).reshape(B_TOT, SEQ, HIDDEN)

    # --- batched per-example attention with in-kernel key-padding mask --------
    km = pk_ref[:, 0:SEQ]                                      # (B, S) f32 key mask
    att = jnp.einsum("bqd,bkd->bqk", q, k,
                     preferred_element_type=jnp.float32) * SCALE   # (B, S, S)
    att = jnp.where((km > 0.0)[:, None, :], att, NEG_INF)
    att = att - jnp.max(att, axis=-1, keepdims=True)
    e = jnp.exp(att)
    # NOTE(intentional): approx reciprocal (EUP slot) -> rows sum to 1 +- ~2^-12.
    p = e * pl.reciprocal(jnp.sum(e, axis=-1, keepdims=True), approx=True)
    ao = jnp.einsum("bqk,bkd->bqd", p.astype(jnp.bfloat16), v,
                    preferred_element_type=jnp.float32).reshape(TOKENS, HIDDEN)
    ao = jnp.dot(ao.astype(jnp.bfloat16), w_ref[:, C_WO:C_W1],
                 preferred_element_type=jnp.float32)
    h = _layer_norm(xf + ao, ln_ref[0:1, :], ln_ref[1:2, :])

    # --- FFN (w2 stored transposed -> contract last dims, no XLU transpose) ---
    ffh = jax.nn.gelu(jnp.dot(h.astype(jnp.bfloat16), w_ref[:, C_W1:C_W2T],
                              preferred_element_type=jnp.float32))
    ff = jax.lax.dot_general(ffh.astype(jnp.bfloat16), w_ref[:, C_W2T:W_COLS],
                             dimension_numbers=(((1,), (1,)), ((), ())),
                             preferred_element_type=jnp.float32)
    h2 = _layer_norm(h + ff, ln_ref[2:3, :], ln_ref[3:4, :])   # (TOKENS, H) f32

    # --- sentence pooling: per-example weights (mask/d or cls one-hot) --------
    # precomputed in the wrapper; tiny f32 VPU multiply + sublane reduce.
    poolw = pk_ref[:, SEQ:2 * SEQ]                              # (B, S) f32
    reps = jnp.sum(h2.reshape(B_TOT, SEQ, HIDDEN) * poolw[:, :, None], axis=1)
    if NORMALIZED:
        reps = reps * jax.lax.rsqrt(jnp.sum(reps * reps, axis=-1, keepdims=True) + EPS)

    # --- in-batch-negative similarity + CE(mean) loss --------------------------
    q_reps = reps[0:BATCH_Q, :]
    p_reps = reps[BATCH_Q:B_TOT, :]
    scores = jax.lax.dot_general(
        q_reps, p_reps, dimension_numbers=(((1,), (1,)), ((), ())),
        preferred_element_type=jnp.float32) / TEMPERATURE          # (Bq, Bp)
    row_max = jnp.max(scores, axis=-1, keepdims=True)
    lse = jnp.log(jnp.sum(jnp.exp(scores - row_max), axis=-1, keepdims=True)) + row_max
    col = jax.lax.broadcasted_iota(jnp.int32, scores.shape, 1)
    row = jax.lax.broadcasted_iota(jnp.int32, scores.shape, 0)
    picked = jnp.sum(jnp.where(col == row * GROUP_SIZE, scores, 0.0),
                     axis=-1, keepdims=True)                       # target = i*group
    loss = jnp.sum(lse - picked, axis=0, keepdims=True) * (1.0 / BATCH_Q)   # (1,1)

    # --- assemble one lane-dense slab and store it with ONE unmasked write -----
    f32 = jnp.float32
    reps_slab = jnp.concatenate(
        [reps, jnp.zeros((B_TOT, OUT_LANES - HIDDEN), f32)], axis=1)        # (6,128)
    scores_slab = jnp.concatenate(
        [scores, jnp.zeros((BATCH_Q, OUT_LANES - BATCH_P), f32)], axis=1)   # (2,128)
    loss_slab = loss * jnp.ones((1, OUT_LANES), f32)                        # (1,128)
    slab = jnp.concatenate(
        [reps_slab,
         jnp.zeros((ROW_SCORES - B_TOT, OUT_LANES), f32),
         scores_slab,
         loss_slab,
         jnp.zeros((OUT_ROWS - ROW_LOSS - 1, OUT_LANES), f32)], axis=0)     # (16,128)
    out_ref[...] = slab


# ----------------------------- wrapper (glue) ---------------------------------
def _pool_weights(mask_f32):
    """Per-example pooling weights. 'mean': mask/sum(mask) (zero-guarded so an
    all-padding example yields zero reps instead of NaN); 'cls': one-hot@0."""
    if POOLING == "mean":
        d = jnp.maximum(jnp.sum(mask_f32, axis=1, keepdims=True), 1.0)
        return mask_f32 / d
    return jnp.zeros_like(mask_f32).at[:, 0].set(1.0)


@jax.jit
def bi_encoder_forward(query_ids, query_mask, passage_ids, passage_mask, params):
    # should_concat path of the module: queries and passages share the encoder,
    # everything runs in ONE grid-less pallas_call.
    ids = jnp.concatenate([query_ids, passage_ids], axis=0)              # (B_TOT, SEQ)
    mask = jnp.concatenate([query_mask, passage_mask], axis=0).astype(jnp.float32)

    # plain-JAX glue: embedding gather + operand packing / pre-casting to bf16
    x = params["emb"][ids].astype(jnp.bfloat16).reshape(TOKENS, HIDDEN)
    pk = jnp.concatenate([mask, _pool_weights(mask)], axis=1)            # (B_TOT, 2*SEQ) f32
    wslab = jnp.concatenate(
        [params["wq"], params["wk"], params["wv"],                       # lanes 0:96
         params["wo"],                                                   # lanes 96:128
         params["w1"],                                                   # lanes 128:192
         params["w2"].T], axis=1).astype(jnp.bfloat16)                   # lanes 192:256
    ln = jnp.concatenate([params["ln1_g"], params["ln1_b"],
                          params["ln2_g"], params["ln2_b"]], axis=0)     # (4, H) f32

    vmem = pl.BlockSpec(memory_space=pltpu.MemorySpace.VMEM)
    out = pl.pallas_call(
        bi_encoder_kernel,
        out_shape=jax.ShapeDtypeStruct((OUT_ROWS, OUT_LANES), jnp.float32),
        in_specs=[vmem, vmem, vmem, vmem],
        out_specs=vmem,
    )(x, pk, wslab, ln)

    reps = out[ROW_REPS:ROW_REPS + B_TOT, 0:HIDDEN]
    q_reps, p_reps = reps[:BATCH_Q], reps[BATCH_Q:]
    scores = out[ROW_SCORES:ROW_SCORES + BATCH_Q, 0:BATCH_P]
    loss = out[ROW_LOSS, 0]
    # MaskedLMOutput(loss=loss, logits=None, ...): training mode returns loss.
    return loss, scores, q_reps, p_reps


# ----------------------------- pure-JAX reference -----------------------------
# The synthetic encoder is defined with the same precision policy as the kernel
# (bf16 matmul operands, f32 accumulation/layernorm/softmax); the remaining
# kernel-vs-reference drift (approx softmax reciprocal, accumulation order) is
# intentional and well inside the assertion tolerances.
def _ref_encode(ids, mask, params):
    x = params["emb"][ids].astype(jnp.bfloat16).astype(jnp.float32)      # (B, S, H)
    m = mask.astype(jnp.float32)

    def mm(a, b):
        return jnp.einsum("bsh,hd->bsd", a.astype(jnp.bfloat16), b.astype(jnp.bfloat16),
                          preferred_element_type=jnp.float32)

    q = mm(x, params["wq"]); k = mm(x, params["wk"]); v = mm(x, params["wv"])
    att = jnp.einsum("bsd,btd->bst", q.astype(jnp.bfloat16), k.astype(jnp.bfloat16),
                     preferred_element_type=jnp.float32) * SCALE
    att = att + (1.0 - m)[:, None, :] * NEG_INF
    p = jax.nn.softmax(att, axis=-1)
    ao = jnp.einsum("bst,bth->bsh", p.astype(jnp.bfloat16), v.astype(jnp.bfloat16),
                    preferred_element_type=jnp.float32)
    ao = mm(ao, params["wo"])
    h = _layer_norm(x + ao, params["ln1_g"], params["ln1_b"])
    ff = mm(jax.nn.gelu(mm(h, params["w1"])), params["w2"])
    h2 = _layer_norm(h + ff, params["ln2_g"], params["ln2_b"])
    if POOLING == "mean":
        d = jnp.maximum(jnp.sum(m, axis=1, keepdims=True), 1.0)
        rep = jnp.sum(h2 * (m / d)[:, :, None], axis=1)
    else:
        rep = h2[:, 0]
    if NORMALIZED:
        rep = rep * jax.lax.rsqrt(jnp.sum(rep * rep, axis=-1, keepdims=True) + EPS)
    return rep


def _ref_forward(query_ids, query_mask, passage_ids, passage_mask, params):
    ids = jnp.concatenate([query_ids, passage_ids], axis=0)
    mask = jnp.concatenate([query_mask, passage_mask], axis=0)
    reps = _ref_encode(ids, mask, params)
    q_reps, p_reps = reps[:BATCH_Q], reps[BATCH_Q:]
    scores = (q_reps @ p_reps.T) / TEMPERATURE
    tgt = jnp.arange(BATCH_Q) * GROUP_SIZE
    logp = jax.nn.log_softmax(scores, axis=-1)
    loss = -jnp.mean(logp[jnp.arange(BATCH_Q), tgt])
    return loss, scores, q_reps, p_reps


# ----------------------------- main -------------------------------------------
if __name__ == "__main__":
    key = jax.random.PRNGKey(0)
    ks = jax.random.split(key, 9)

    params = {
        "emb":   jax.random.normal(ks[0], (VOCAB, HIDDEN), jnp.float32) * 0.02,
        "wq":    jax.random.normal(ks[1], (HIDDEN, HIDDEN), jnp.float32) * 0.05,
        "wk":    jax.random.normal(ks[2], (HIDDEN, HIDDEN), jnp.float32) * 0.05,
        "wv":    jax.random.normal(ks[3], (HIDDEN, HIDDEN), jnp.float32) * 0.05,
        "wo":    jax.random.normal(ks[4], (HIDDEN, HIDDEN), jnp.float32) * 0.05,
        "ln1_g": jnp.ones((1, HIDDEN), jnp.float32),
        "ln1_b": jnp.zeros((1, HIDDEN), jnp.float32),
        "w1":    jax.random.normal(ks[5], (HIDDEN, FFN), jnp.float32) * 0.05,
        "w2":    jax.random.normal(ks[6], (FFN, HIDDEN), jnp.float32) * 0.05,
        "ln2_g": jnp.ones((1, HIDDEN), jnp.float32),
        "ln2_b": jnp.zeros((1, HIDDEN), jnp.float32),
    }

    query_ids = jax.random.randint(ks[7], (BATCH_Q, SEQ), 0, VOCAB, jnp.int32)
    passage_ids = jax.random.randint(ks[8], (BATCH_P, SEQ), 0, VOCAB, jnp.int32)
    # attention masks with a little right padding
    query_mask = jnp.concatenate(
        [jnp.ones((BATCH_Q, SEQ - 2), jnp.int32), jnp.zeros((BATCH_Q, 2), jnp.int32)], axis=1)
    passage_mask = jnp.concatenate(
        [jnp.ones((BATCH_P, SEQ - 1), jnp.int32), jnp.zeros((BATCH_P, 1), jnp.int32)], axis=1)

    loss, scores, q_reps, p_reps = bi_encoder_forward(
        query_ids, query_mask, passage_ids, passage_mask, params)
    jax.block_until_ready((loss, scores, q_reps, p_reps))

    ref_loss, ref_scores, ref_q, ref_p = _ref_forward(
        query_ids, query_mask, passage_ids, passage_mask, params)

    assert np.allclose(np.asarray(q_reps), np.asarray(ref_q), rtol=1e-2, atol=1e-2), \
        "q_reps mismatch vs reference"
    assert np.allclose(np.asarray(p_reps), np.asarray(ref_p), rtol=1e-2, atol=1e-2), \
        "p_reps mismatch vs reference"
    assert np.allclose(np.asarray(scores), np.asarray(ref_scores), rtol=1e-2, atol=5e-2), \
        "scores mismatch vs reference"
    assert np.allclose(np.asarray(loss), np.asarray(ref_loss), rtol=1e-2, atol=5e-2), \
        "loss mismatch vs reference"

    print("KERNEL_OK")
</pallas_src>

<mosaic_0001>
module attributes {stable_mosaic.version = 11 : i64} {
  func.func @bi_encoder_kernel(%arg0: memref<48x32xbf16, #tpu.memory_space<vmem>>, %arg1: memref<6x16xf32, #tpu.memory_space<vmem>>, %arg2: memref<32x256xbf16, #tpu.memory_space<vmem>>, %arg3: memref<4x32xf32, #tpu.memory_space<vmem>>, %arg4: memref<16x128xf32, #tpu.memory_space<vmem>>) attributes {dimension_semantics = [], scalar_prefetch = 0 : i64, scratch_operands = 0 : i64, tpu.core_type = #tpu.core_type<tc>} {
    %c0 = arith.constant 0 : index
    %c0_0 = arith.constant 0 : index
    %0 = vector.load %arg0[%c0, %c0_0] : memref<48x32xbf16, #tpu.memory_space<vmem>>, vector<48x32xbf16>
    %1 = arith.extf %0 : vector<48x32xbf16> to vector<48x32xf32>
    %c0_1 = arith.constant 0 : index
    %c0_2 = arith.constant 0 : index
    %2 = vector.load %arg2[%c0_1, %c0_2] : memref<32x256xbf16, #tpu.memory_space<vmem>>, vector<32x96xbf16>
    %cst = arith.constant dense<0.000000e+00> : vector<48x96xf32>
    %3 = tpu.matmul %0, %2, %cst {dimension_numbers = #tpu.dot_dimension_numbers<[1], [0], [0], [1], [0, 0, 1, 1], [], []>} : vector<48x32xbf16>, vector<32x96xbf16>, vector<48x96xf32> -> vector<48x96xf32>
    %4 = vector.extract_strided_slice %3 {offsets = [0, 0], sizes = [48, 32], strides = [1, 1]} : vector<48x96xf32> to vector<48x32xf32>
    %5 = arith.truncf %4 : vector<48x32xf32> to vector<48x32xbf16>
    %6 = vector.shape_cast %5 : vector<48x32xbf16> to vector<6x8x32xbf16>
    %7 = vector.extract_strided_slice %3 {offsets = [0, 32], sizes = [48, 32], strides = [1, 1]} : vector<48x96xf32> to vector<48x32xf32>
    %8 = arith.truncf %7 : vector<48x32xf32> to vector<48x32xbf16>
    %9 = vector.shape_cast %8 : vector<48x32xbf16> to vector<6x8x32xbf16>
    %10 = vector.extract_strided_slice %3 {offsets = [0, 64], sizes = [48, 32], strides = [1, 1]} : vector<48x96xf32> to vector<48x32xf32>
    %11 = arith.truncf %10 : vector<48x32xf32> to vector<48x32xbf16>
    %12 = vector.shape_cast %11 : vector<48x32xbf16> to vector<6x8x32xbf16>
    %c0_3 = arith.constant 0 : index
    %c0_4 = arith.constant 0 : index
    %13 = vector.load %arg1[%c0_3, %c0_4] : memref<6x16xf32, #tpu.memory_space<vmem>>, vector<6x8xf32>
    "tpu.trace_start"() <{level = 10 : i32, message = "bqd,bkd->bqk"}> : () -> ()
    %cst_5 = arith.constant dense<0.000000e+00> : vector<6x8x8xf32>
    %14 = tpu.matmul %6, %9, %cst_5 {dimension_numbers = #tpu.dot_dimension_numbers<[2], [2], [1], [1], [0, 0, 0, 1, 1, 1], [0], [0]>} : vector<6x8x32xbf16>, vector<6x8x32xbf16>, vector<6x8x8xf32> -> vector<6x8x8xf32>
    "tpu.trace_stop"() : () -> ()
    %cst_6 = arith.constant 0.176776692 : f32
    %15 = vector.broadcast %cst_6 : f32 to vector<6x8x8xf32>
    %16 = arith.mulf %14, %15 : vector<6x8x8xf32>
    %cst_7 = arith.constant 0.000000e+00 : f32
    %17 = vector.broadcast %cst_7 : f32 to vector<6x8xf32>
    %18 = arith.cmpf ogt, %13, %17 : vector<6x8xf32>
    %19 = vector.shape_cast %18 : vector<6x8xi1> to vector<6x1x8xi1>
    %cst_8 = arith.constant -1.000000e+09 : f32
    %20 = vector.shape_cast %19 : vector<6x1x8xi1> to vector<6x1x8xi1>
    %21 = vector.broadcast %20 : vector<6x1x8xi1> to vector<6x8x8xi1>
    %22 = vector.broadcast %cst_8 : f32 to vector<6x8x8xf32>
    %23 = arith.select %21, %16, %22 : vector<6x8x8xi1>, vector<6x8x8xf32>
    %cst_9 = arith.constant dense<0xFF800000> : vector<6x8xf32>
    %24 = vector.multi_reduction <maximumf>, %23, %cst_9 [2] : vector<6x8x8xf32> to vector<6x8xf32>
    %25 = vector.shape_cast %24 : vector<6x8xf32> to vector<6x8x1xf32>
    %26 = vector.broadcast %25 : vector<6x8x1xf32> to vector<6x8x8xf32>
    %27 = arith.subf %23, %26 : vector<6x8x8xf32>
    %28 = math.exp %27 : vector<6x8x8xf32>
    %cst_10 = arith.constant dense<0.000000e+00> : vector<6x8xf32>
    %29 = vector.multi_reduction <add>, %28, %cst_10 [2] : vector<6x8x8xf32> to vector<6x8xf32>
    %30 = vector.shape_cast %29 : vector<6x8xf32> to vector<6x8x1xf32>
    %31 = tpu.reciprocal %30 {approx = true} : vector<6x8x1xf32> -> vector<6x8x1xf32>
    %32 = vector.broadcast %31 : vector<6x8x1xf32> to vector<6x8x8xf32>
    %33 = arith.mulf %28, %32 : vector<6x8x8xf32>
    %34 = arith.truncf %33 : vector<6x8x8xf32> to vector<6x8x8xbf16>
    "tpu.trace_start"() <{level = 10 : i32, message = "bqk,bkd->bqd"}> : () -> ()
    %cst_11 = arith.constant dense<0.000000e+00> : vector<6x8x32xf32>
    %35 = tpu.matmul %34, %12, %cst_11 {dimension_numbers = #tpu.dot_dimension_numbers<[2], [1], [1], [2], [0, 0, 0, 1, 1, 2], [0], [0]>} : vector<6x8x8xbf16>, vector<6x8x32xbf16>, vector<6x8x32xf32> -> vector<6x8x32xf32>
    "tpu.trace_stop"() : () -> ()
    %36 = vector.shape_cast %35 : vector<6x8x32xf32> to vector<48x32xf32>
    %37 = arith.truncf %36 : vector<48x32xf32> to vector<48x32xbf16>
    %c0_12 = arith.constant 0 : index
    %c96 = arith.constant 96 : index
    %38 = vector.load %arg2[%c0_12, %c96] : memref<32x256xbf16, #tpu.memory_space<vmem>>, vector<32x32xbf16>
    %cst_13 = arith.constant dense<0.000000e+00> : vector<48x32xf32>
    %39 = tpu.matmul %37, %38, %cst_13 {dimension_numbers = #tpu.dot_dimension_numbers<[1], [0], [0], [1], [0, 0, 1, 1], [], []>} : vector<48x32xbf16>, vector<32x32xbf16>, vector<48x32xf32> -> vector<48x32xf32>
    %40 = arith.addf %1, %39 : vector<48x32xf32>
    %c0_14 = arith.constant 0 : index
    %c0_15 = arith.constant 0 : index
    %41 = vector.load %arg3[%c0_14, %c0_15] : memref<4x32xf32, #tpu.memory_space<vmem>>, vector<1x32xf32>
    %c1 = arith.constant 1 : index
    %c0_16 = arith.constant 0 : index
    %42 = vector.load %arg3[%c1, %c0_16] : memref<4x32xf32, #tpu.memory_space<vmem>>, vector<1x32xf32>
    %cst_17 = arith.constant dense<0.000000e+00> : vector<48xf32>
    %43 = vector.multi_reduction <add>, %40, %cst_17 [1] : vector<48x32xf32> to vector<48xf32>
    %44 = vector.shape_cast %43 : vector<48xf32> to vector<48x1xf32>
    %cst_18 = arith.constant 3.200000e+01 : f32
    %45 = vector.broadcast %cst_18 : f32 to vector<48x1xf32>
    %46 = arith.divf %44, %45 : vector<48x1xf32>
    %47 = vector.broadcast %46 : vector<48x1xf32> to vector<48x32xf32>
    %48 = arith.subf %40, %47 : vector<48x32xf32>
    %49 = arith.mulf %48, %48 : vector<48x32xf32>
    %cst_19 = arith.constant dense<0.000000e+00> : vector<48xf32>
    %50 = vector.multi_reduction <add>, %49, %cst_19 [1] : vector<48x32xf32> to vector<48xf32>
    %51 = vector.shape_cast %50 : vector<48xf32> to vector<48x1xf32>
    %cst_20 = arith.constant 3.200000e+01 : f32
    %52 = vector.broadcast %cst_20 : f32 to vector<48x1xf32>
    %53 = arith.divf %51, %52 : vector<48x1xf32>
    %54 = vector.broadcast %46 : vector<48x1xf32> to vector<48x32xf32>
    %55 = arith.subf %40, %54 : vector<48x32xf32>
    %cst_21 = arith.constant 9.99999974E-6 : f32
    %56 = vector.broadcast %cst_21 : f32 to vector<48x1xf32>
    %57 = arith.addf %53, %56 : vector<48x1xf32>
    %58 = math.rsqrt %57 : vector<48x1xf32>
    %59 = vector.broadcast %58 : vector<48x1xf32> to vector<48x32xf32>
    %60 = arith.mulf %55, %59 : vector<48x32xf32>
    %61 = vector.broadcast %41 : vector<1x32xf32> to vector<48x32xf32>
    %62 = arith.mulf %60, %61 : vector<48x32xf32>
    %63 = vector.broadcast %42 : vector<1x32xf32> to vector<48x32xf32>
    %64 = arith.addf %62, %63 : vector<48x32xf32>
    %65 = arith.truncf %64 : vector<48x32xf32> to vector<48x32xbf16>
    %c0_22 = arith.constant 0 : index
    %c128 = arith.constant 128 : index
    %66 = vector.load %arg2[%c0_22, %c128] : memref<32x256xbf16, #tpu.memory_space<vmem>>, vector<32x64xbf16>
    %cst_23 = arith.constant dense<0.000000e+00> : vector<48x64xf32>
    %67 = tpu.matmul %65, %66, %cst_23 {dimension_numbers = #tpu.dot_dimension_numbers<[1], [0], [0], [1], [0, 0, 1, 1], [], []>} : vector<48x32xbf16>, vector<32x64xbf16>, vector<48x64xf32> -> vector<48x64xf32>
    %68 = arith.mulf %67, %67 : vector<48x64xf32>
    %69 = arith.mulf %67, %68 : vector<48x64xf32>
    %cst_24 = arith.constant 4.471500e-02 : f32
    %70 = vector.broadcast %cst_24 : f32 to vector<48x64xf32>
    %71 = arith.mulf %70, %69 : vector<48x64xf32>
    %72 = arith.addf %67, %71 : vector<48x64xf32>
    %cst_25 = arith.constant 0.797884583 : f32
    %73 = vector.broadcast %cst_25 : f32 to vector<48x64xf32>
    %74 = arith.mulf %73, %72 : vector<48x64xf32>
    %75 = math.tanh %74 : vector<48x64xf32>
    %cst_26 = arith.constant 1.000000e+00 : f32
    %76 = vector.broadcast %cst_26 : f32 to vector<48x64xf32>
    %77 = arith.addf %76, %75 : vector<48x64xf32>
    %cst_27 = arith.constant 5.000000e-01 : f32
    %78 = vector.broadcast %cst_27 : f32 to vector<48x64xf32>
    %79 = arith.mulf %78, %77 : vector<48x64xf32>
    %80 = arith.mulf %67, %79 : vector<48x64xf32>
    %81 = arith.truncf %80 : vector<48x64xf32> to vector<48x64xbf16>
    %c0_28 = arith.constant 0 : index
    %c192 = arith.constant 192 : index
    %82 = vector.load %arg2[%c0_28, %c192] : memref<32x256xbf16, #tpu.memory_space<vmem>>, vector<32x64xbf16>
    %cst_29 = arith.constant dense<0.000000e+00> : vector<48x32xf32>
    %83 = tpu.matmul %81, %82, %cst_29 {dimension_numbers = #tpu.dot_dimension_numbers<[1], [1], [0], [0], [0, 0, 1, 0], [], []>} : vector<48x64xbf16>, vector<32x64xbf16>, vector<48x32xf32> -> vector<48x32xf32>
    %84 = arith.addf %64, %83 : vector<48x32xf32>
    %c2 = arith.constant 2 : index
    %c0_30 = arith.constant 0 : index
    %85 = vector.load %arg3[%c2, %c0_30] : memref<4x32xf32, #tpu.memory_space<vmem>>, vector<1x32xf32>
    %c3 = arith.constant 3 : index
    %c0_31 = arith.constant 0 : index
    %86 = vector.load %arg3[%c3, %c0_31] : memref<4x32xf32, #tpu.memory_space<vmem>>, vector<1x32xf32>
    %cst_32 = arith.constant dense<0.000000e+00> : vector<48xf32>
    %87 = vector.multi_reduction <add>, %84, %cst_32 [1] : vector<48x32xf32> to vector<48xf32>
    %88 = vector.shape_cast %87 : vector<48xf32> to vector<48x1xf32>
    %cst_33 = arith.constant 3.200000e+01 : f32
    %89 = vector.broadcast %cst_33 : f32 to vector<48x1xf32>
    %90 = arith.divf %88, %89 : vector<48x1xf32>
    %91 = vector.broadcast %90 : vector<48x1xf32> to vector<48x32xf32>
    %92 = arith.subf %84, %91 : vector<48x32xf32>
    %93 = arith.mulf %92, %92 : vector<48x32xf32>
    %cst_34 = arith.constant dense<0.000000e+00> : vector<48xf32>
    %94 = vector.multi_reduction <add>, %93, %cst_34 [1] : vector<48x32xf32> to vector<48xf32>
    %95 = vector.shape_cast %94 : vector<48xf32> to vector<48x1xf32>
    %cst_35 = arith.constant 3.200000e+01 : f32
    %96 = vector.broadcast %cst_35 : f32 to vector<48x1xf32>
    %97 = arith.divf %95, %96 : vector<48x1xf32>
    %98 = vector.broadcast %90 : vector<48x1xf32> to vector<48x32xf32>
    %99 = arith.subf %84, %98 : vector<48x32xf32>
    %cst_36 = arith.constant 9.99999974E-6 : f32
    %100 = vector.broadcast %cst_36 : f32 to vector<48x1xf32>
    %101 = arith.addf %97, %100 : vector<48x1xf32>
    %102 = math.rsqrt %101 : vector<48x1xf32>
    %103 = vector.broadcast %102 : vector<48x1xf32> to vector<48x32xf32>
    %104 = arith.mulf %99, %103 : vector<48x32xf32>
    %105 = vector.broadcast %85 : vector<1x32xf32> to vector<48x32xf32>
    %106 = arith.mulf %104, %105 : vector<48x32xf32>
    %107 = vector.broadcast %86 : vector<1x32xf32> to vector<48x32xf32>
    %108 = arith.addf %106, %107 : vector<48x32xf32>
    %c0_37 = arith.constant 0 : index
    %c8 = arith.constant 8 : index
    %109 = vector.load %arg1[%c0_37, %c8] : memref<6x16xf32, #tpu.memory_space<vmem>>, vector<6x8xf32>
    %110 = vector.shape_cast %108 : vector<48x32xf32> to vector<6x8x32xf32>
    %111 = vector.shape_cast %109 : vector<6x8xf32> to vector<6x8x1xf32>
    %112 = vector.broadcast %111 : vector<6x8x1xf32> to vector<6x8x32xf32>
    %113 = arith.mulf %110, %112 : vector<6x8x32xf32>
    %cst_38 = arith.constant dense<0.000000e+00> : vector<6x32xf32>
    %114 = vector.multi_reduction <add>, %113, %cst_38 [1] : vector<6x8x32xf32> to vector<6x32xf32>
    %115 = arith.mulf %114, %114 : vector<6x32xf32>
    %cst_39 = arith.constant dense<0.000000e+00> : vector<6xf32>
    %116 = vector.multi_reduction <add>, %115, %cst_39 [1] : vector<6x32xf32> to vector<6xf32>
    %117 = vector.shape_cast %116 : vector<6xf32> to vector<6x1xf32>
    %cst_40 = arith.constant 9.99999996E-13 : f32
    %118 = vector.broadcast %cst_40 : f32 to vector<6x1xf32>
    %119 = arith.addf %117, %118 : vector<6x1xf32>
    %120 = math.rsqrt %119 : vector<6x1xf32>
    %121 = vector.broadcast %120 : vector<6x1xf32> to vector<6x32xf32>
    %122 = arith.mulf %114, %121 : vector<6x32xf32>
    %123 = vector.extract_strided_slice %122 {offsets = [0, 0], sizes = [2, 32], strides = [1, 1]} : vector<6x32xf32> to vector<2x32xf32>
    %124 = vector.extract_strided_slice %122 {offsets = [2, 0], sizes = [4, 32], strides = [1, 1]} : vector<6x32xf32> to vector<4x32xf32>
    %cst_41 = arith.constant dense<0.000000e+00> : vector<2x4xf32>
    %125 = tpu.matmul %123, %124, %cst_41 {dimension_numbers = #tpu.dot_dimension_numbers<[1], [1], [0], [0], [0, 0, 1, 0], [], []>} : vector<2x32xf32>, vector<4x32xf32>, vector<2x4xf32> -> vector<2x4xf32>
    %cst_42 = arith.constant 5.000000e-02 : f32
    %126 = vector.broadcast %cst_42 : f32 to vector<2x4xf32>
    %127 = arith.divf %125, %126 : vector<2x4xf32>
    %cst_43 = arith.constant dense<0xFF800000> : vector<2xf32>
    %128 = vector.multi_reduction <maximumf>, %127, %cst_43 [1] : vector<2x4xf32> to vector<2xf32>
    %129 = vector.shape_cast %128 : vector<2xf32> to vector<2x1xf32>
    %130 = vector.broadcast %129 : vector<2x1xf32> to vector<2x4xf32>
    %131 = arith.subf %127, %130 : vector<2x4xf32>
    %132 = math.exp %131 : vector<2x4xf32>
    %cst_44 = arith.constant dense<0.000000e+00> : vector<2xf32>
    %133 = vector.multi_reduction <add>, %132, %cst_44 [1] : vector<2x4xf32> to vector<2xf32>
    %134 = vector.shape_cast %133 : vector<2xf32> to vector<2x1xf32>
    %135 = math.log %134 : vector<2x1xf32>
    %136 = arith.addf %135, %129 : vector<2x1xf32>
    %137 = tpu.iota {dimensions = array<i32: 1>} : vector<2x4xi32>
    %138 = tpu.iota {dimensions = array<i32: 0>} : vector<2x4xi32>
    %c2_i32 = arith.constant 2 : i32
    %139 = vector.broadcast %c2_i32 : i32 to vector<2x4xi32>
    %140 = arith.muli %138, %139 : vector<2x4xi32>
    %141 = arith.cmpi eq, %137, %140 : vector<2x4xi32>
    %cst_45 = arith.constant 0.000000e+00 : f32
    %142 = vector.broadcast %cst_45 : f32 to vector<2x4xf32>
    %143 = arith.select %141, %127, %142 : vector<2x4xi1>, vector<2x4xf32>
    %cst_46 = arith.constant dense<0.000000e+00> : vector<2xf32>
    %144 = vector.multi_reduction <add>, %143, %cst_46 [1] : vector<2x4xf32> to vector<2xf32>
    %145 = vector.shape_cast %144 : vector<2xf32> to vector<2x1xf32>
    %146 = arith.subf %136, %145 : vector<2x1xf32>
    %cst_47 = arith.constant dense<0.000000e+00> : vector<1xf32>
    %147 = vector.multi_reduction <add>, %146, %cst_47 [0] : vector<2x1xf32> to vector<1xf32>
    %148 = vector.shape_cast %147 : vector<1xf32> to vector<1x1xf32>
    %cst_48 = arith.constant 5.000000e-01 : f32
    %149 = vector.broadcast %cst_48 : f32 to vector<1x1xf32>
    %150 = arith.mulf %148, %149 : vector<1x1xf32>
    %cst_49 = arith.constant 0.000000e+00 : f32
    %151 = vector.broadcast %cst_49 : f32 to vector<6x96xf32>
    %152 = tpu.concatenate %122, %151 in 1 : vector<6x32xf32>, vector<6x96xf32> -> vector<6x128xf32>
    %cst_50 = arith.constant 0.000000e+00 : f32
    %153 = vector.broadcast %cst_50 : f32 to vector<2x124xf32>
    %154 = tpu.concatenate %127, %153 in 1 : vector<2x4xf32>, vector<2x124xf32> -> vector<2x128xf32>
    %cst_51 = arith.constant 1.000000e+00 : f32
    %155 = vector.broadcast %cst_51 : f32 to vector<1x128xf32>
    %156 = vector.broadcast %150 : vector<1x1xf32> to vector<1x128xf32>
    %157 = arith.mulf %156, %155 : vector<1x128xf32>
    %cst_52 = arith.constant 0.000000e+00 : f32
    %158 = vector.broadcast %cst_52 : f32 to vector<2x128xf32>
    %cst_53 = arith.constant 0.000000e+00 : f32
    %159 = vector.broadcast %cst_53 : f32 to vector<5x128xf32>
    %160 = tpu.concatenate %152, %158, %154, %157, %159 in 0 : vector<6x128xf32>, vector<2x128xf32>, vector<2x128xf32>, vector<1x128xf32>, vector<5x128xf32> -> vector<16x128xf32>
    %c0_54 = arith.constant 0 : index
    %c0_55 = arith.constant 0 : index
    %161 = vector.load %arg4[%c0_54, %c0_55] : memref<16x128xf32, #tpu.memory_space<vmem>>, vector<16x128xf32>
    tpu.vector_store %arg4[%c0_54, %c0_55], %160 {strides = array<i32>} : memref<16x128xf32, #tpu.memory_space<vmem>>, vector<16x128xf32>,
    return
  }
}

</mosaic_0001>

<llo_original>
// kernel: bi_encoder_forward.1
$region0: #{bi_encoder_forward.1}
  #allocation0 [shape = 'u32[]', space=smem, size = 0x4, offset = 0x4, fixed_abs, tag = 'smem constant byte address 0x4 - core index']
  #allocation1 [shape = 'u32[72,128]{1,0:T(1,128)}', space=vmem, size = 0x9000, scoped, tag = 'internal scratch']
  %s0 = inlined_call_operand.vmem [shape: bf16[48,32], index: 0, kind: input, shape index: {}]
  %s1 = inlined_call_operand.vmem [shape: f32[6,16], index: 1, kind: input, shape index: {}]
  %s2 = inlined_call_operand.vmem [shape: bf16[32,256], index: 2, kind: input, shape index: {}]
  %s3 = inlined_call_operand.vmem [shape: f32[4,32], index: 3, kind: input, shape index: {}]
  %s4 = inlined_call_operand.vmem [shape: f32[16,128], index: 4, kind: output, shape index: {}]
  %s5 = sld [smem:[#allocation0]]
  $region26: #{bi_encoder_forward.1} parent=0
    _
  %s7 = ssub.s32 1, %s5
  %s8 = scalar_select 0, %s7, %s5
  // Predicated region
  $region2: #{bi_encoder_forward.1} parent=0 // pred_check
    _
  $region3: #{bi_encoder_forward.1} parent=0 // pred_check_branch
    %10 = sbr.rel (0) target = $region5
  $region4: #{bi_encoder_forward.1} parent=0 // pred_region
    _
  $region5: #{bi_encoder_forward.1} parent=0 // pred_fallthru
    _
  // Predicated region
  $region6: #{bi_encoder_forward.1} parent=0 // pred_check
    _
  $region7: #{bi_encoder_forward.1} parent=0 // pred_check_branch
    %12 = sbr.rel (0) target = $region9
  $region8: #{bi_encoder_forward.1} parent=0 // pred_region
    _
  $region9: #{bi_encoder_forward.1} parent=0 // pred_fallthru
    _
  // Predicated region
  $region10: #{bi_encoder_forward.1} parent=0 // pred_check
    _
  $region11: #{bi_encoder_forward.1} parent=0 // pred_check_branch
    %14 = sbr.rel (0) target = $region13
  $region12: #{bi_encoder_forward.1} parent=0 // pred_region
    _
  $region13: #{bi_encoder_forward.1} parent=0 // pred_fallthru
    _
  // Predicated region
  $region14: #{bi_encoder_forward.1} parent=0 // pred_check
    _
  $region15: #{bi_encoder_forward.1} parent=0 // pred_check_branch
    %16 = sbr.rel (0) target = $region17
  $region16: #{bi_encoder_forward.1} parent=0 // pred_region
    _
  $region17: #{bi_encoder_forward.1} parent=0 // pred_fallthru
    _
  %v18 = vld [vmem:[%s0] sm:$0xf]
  %v19 = vld [vmem:[%s0 + $0x4] sm:$0xf]
  %v20 = vld [vmem:[%s0 + $0x8] sm:$0xf]
  %v21 = vld [vmem:[%s0 + $0xc] sm:$0xf]
  %v22 = vld [vmem:[%s0 + $0x10] sm:$0xf]
  %v23 = vld [vmem:[%s0 + $0x14] sm:$0xf]
  %v24 = vunpack.c.l.bf16 %v18
  %v25 = vunpack.c.l.bf16 %v19
  %v26 = vunpack.c.l.bf16 %v20
  %v27 = vunpack.c.l.bf16 %v21
  %v28 = vunpack.c.l.bf16 %v22
  %v29 = vunpack.c.l.bf16 %v23
  %v30 = vld [vmem:[%s2] sm:$0xf]
  %v31 = vld [vmem:[%s2 + $0x8] sm:$0xf]
  %v32 = vld [vmem:[%s2 + $0x10] sm:$0xf]
  %v33 = vld [vmem:[%s2 + $0x18] sm:$0xf]
  %v40 = vunpack.c.l.b16 %v18
  %v41 = vunpack.c.l.b16 %v19
  %v42 = vunpack.c.l.b16 %v20
  %v43 = vunpack.c.l.b16 %v21
  %v44 = vunpack.c.l.b16 %v22
  %v45 = vunpack.c.l.b16 %v23
  %v46 = vpack.c.b16 %v41, %v40
  %v47 = vpack.c.b16 %v43, %v42
  %v48 = vpack.c.b16 %v45, %v44
  %v53 = vunpack.c.l.b16 %v30
  %v54 = vunpack.c.l.b16 %v31
  %v55 = vunpack.c.l.b16 %v32
  %v56 = vunpack.c.l.b16 %v33
  %v57 = vpack.c.b16 %v54, %v53
  %v58 = vpack.c.b16 %v56, %v55
  %vm61 = vcmask 261120
  %v63 = vsel %vm61, %v46, 0
  %v66 = vsel %vm61, %v47, 0
  %v69 = vsel %vm61, %v48, 0
  %71 = vmatpush.bf16.msra.mxu0 0
  %72 = vmatpush.bf16.msra.mxu0 0
  %73 = vmatpush.bf16.msra.mxu0 0
  %74 = vmatpush.bf16.msra.mxu0 0
  %75 = vmatpush.bf16.msra.mxu0 0
  %76 = vmatpush.bf16.msra.mxu0 0
  %77 = vmatpush.bf16.msra.mxu0 %v58
  %78 = vmatpush.bf16.msra.mxu0 %v57
  %79 = vmatmul.bf16.gmra.mxu0 %v63
  %v80 = vpop.f32.mrf.mxu0
  %v81 = vadd.f32 0.0, %v80
  %v82 = vpop.f32.mrf.mxu0
  %v83 = vadd.f32 0.0, %v82
  %84 = vmatmul.bf16.gmra.mxu0 %v66
  %v85 = vpop.f32.mrf.mxu0
  %v86 = vadd.f32 0.0, %v85
  %v87 = vpop.f32.mrf.mxu0
  %v88 = vadd.f32 0.0, %v87
  %89 = vmatmul.bf16.gmra.mxu0 %v69
  %v90 = vpop.f32.mrf.mxu0
  %v91 = vadd.f32 0.0, %v90
  %v92 = vpop.f32.mrf.mxu0
  %v93 = vadd.f32 0.0, %v92
  %94 = vdwg.mxu0
  %v95 = vpack.c.bf16 %v81, %v81
  %v96 = vpack.c.bf16 %v83, %v83
  %v97 = vpack.c.bf16 %v86, %v86
  %v98 = vpack.c.bf16 %v88, %v88
  %v99 = vpack.c.bf16 %v91, %v91
  %v100 = vpack.c.bf16 %v93, %v93
  %v101 = vld [vmem:[%s1] sm:$0x3f]
  %v103 = vunpack.c.l.b16 %v95
  %v104 = vpack.c.b16 %v103, %v103
  %105 = vrot.lane.b32.xlu0 %v104, 96
  %v106 = vpop.permute.xlu0 %105
  %v108 = vsel %vm61, %v95, 0
  %v111 = vsel %vm61, %v106, 0
  %113 = vmatpush.bf16.xpose.msra.mxu0 0
  %114 = vmatpush.bf16.xpose.msra.mxu0 0
  %115 = vmatpush.bf16.xpose.msra.mxu0 0
  %116 = vmatpush.bf16.xpose.msra.mxu0 0
  %117 = vmatpush.bf16.xpose.msra.mxu0 0
  %118 = vmatpush.bf16.xpose.msra.mxu0 0
  %119 = vmatpush.bf16.xpose.msra.mxu0 0
  %120 = vmatpush.bf16.xpose.msra.mxu0 %v111
  %121 = vmatmul.bf16.gmra.mxu0 %v108
  %v122 = vpop.f32.mrf.mxu0
  %v123 = vadd.f32 0.0, %v122
  %v124 = vpop.f32.mrf.mxu0
  %125 = vdwg.mxu0
  %v127 = vunpack.c.l.b16 %v96
  %v128 = vpack.c.b16 %v127, %v127
  %129 = vrot.lane.b32.xlu0 %v128, 96
  %v130 = vpop.permute.xlu0 %129
  %v132 = vsel %vm61, %v96, 0
  %v135 = vsel %vm61, %v130, 0
  %137 = vmatpush.bf16.xpose.msra.mxu0 0
  %138 = vmatpush.bf16.xpose.msra.mxu0 0
  %139 = vmatpush.bf16.xpose.msra.mxu0 0
  %140 = vmatpush.bf16.xpose.msra.mxu0 0
  %141 = vmatpush.bf16.xpose.msra.mxu0 0
  %142 = vmatpush.bf16.xpose.msra.mxu0 0
  %143 = vmatpush.bf16.xpose.msra.mxu0 0
  %144 = vmatpush.bf16.xpose.msra.mxu0 %v135
  %145 = vmatmul.bf16.gmra.mxu0 %v132
  %v146 = vpop.f32.mrf.mxu0
  %v147 = vadd.f32 0.0, %v146
  %v148 = vpop.f32.mrf.mxu0
  %149 = vdwg.mxu0
  %v151 = vunpack.c.l.b16 %v97
  %v152 = vpack.c.b16 %v151, %v151
  %153 = vrot.lane.b32.xlu0 %v152, 96
  %v154 = vpop.permute.xlu0 %153
  %v156 = vsel %vm61, %v97, 0
  %v159 = vsel %vm61, %v154, 0
  %161 = vmatpush.bf16.xpose.msra.mxu0 0
  %162 = vmatpush.bf16.xpose.msra.mxu0 0
  %163 = vmatpush.bf16.xpose.msra.mxu0 0
  %164 = vmatpush.bf16.xpose.msra.mxu0 0
  %165 = vmatpush.bf16.xpose.msra.mxu0 0
  %166 = vmatpush.bf16.xpose.msra.mxu0 0
  %167 = vmatpush.bf16.xpose.msra.mxu0 0
  %168 = vmatpush.bf16.xpose.msra.mxu0 %v159
  %169 = vmatmul.bf16.gmra.mxu0 %v156
  %v170 = vpop.f32.mrf.mxu0
  %v171 = vadd.f32 0.0, %v170
  %v172 = vpop.f32.mrf.mxu0
  %173 = vdwg.mxu0
  %v175 = vunpack.c.l.b16 %v98
  %v176 = vpack.c.b16 %v175, %v175
  %177 = vrot.lane.b32.xlu0 %v176, 96
  %v178 = vpop.permute.xlu0 %177
  %v180 = vsel %vm61, %v98, 0
  %v183 = vsel %vm61, %v178, 0
  %185 = vmatpush.bf16.xpose.msra.mxu0 0
  %186 = vmatpush.bf16.xpose.msra.mxu0 0
  %187 = vmatpush.bf16.xpose.msra.mxu0 0
  %188 = vmatpush.bf16.xpose.msra.mxu0 0
  %189 = vmatpush.bf16.xpose.msra.mxu0 0
  %190 = vmatpush.bf16.xpose.msra.mxu0 0
  %191 = vmatpush.bf16.xpose.msra.mxu0 0
  %192 = vmatpush.bf16.xpose.msra.mxu0 %v183
  %193 = vmatmul.bf16.gmra.mxu0 %v180
  %v194 = vpop.f32.mrf.mxu0
  %v195 = vadd.f32 0.0, %v194
  %v196 = vpop.f32.mrf.mxu0
  %197 = vdwg.mxu0
  %v199 = vunpack.c.l.b16 %v99
  %v200 = vpack.c.b16 %v199, %v199
  %201 = vrot.lane.b32.xlu0 %v200, 96
  %v202 = vpop.permute.xlu0 %201
  %v204 = vsel %vm61, %v99, 0
  %v207 = vsel %vm61, %v202, 0
  %209 = vmatpush.bf16.xpose.msra.mxu0 0
  %210 = vmatpush.bf16.xpose.msra.mxu0 0
  %211 = vmatpush.bf16.xpose.msra.mxu0 0
  %212 = vmatpush.bf16.xpose.msra.mxu0 0
  %213 = vmatpush.bf16.xpose.msra.mxu0 0
  %214 = vmatpush.bf16.xpose.msra.mxu0 0
  %215 = vmatpush.bf16.xpose.msra.mxu0 0
  %216 = vmatpush.bf16.xpose.msra.mxu0 %v207
  %217 = vmatmul.bf16.gmra.mxu0 %v204
  %v218 = vpop.f32.mrf.mxu0
  %v219 = vadd.f32 0.0, %v218
  %v220 = vpop.f32.mrf.mxu0
  %221 = vdwg.mxu0
  %v223 = vunpack.c.l.b16 %v100
  %v224 = vpack.c.b16 %v223, %v223
  %225 = vrot.lane.b32.xlu0 %v224, 96
  %v226 = vpop.permute.xlu0 %225
  %v228 = vsel %vm61, %v100, 0
  %v231 = vsel %vm61, %v226, 0
  %233 = vmatpush.bf16.xpose.msra.mxu0 0
  %234 = vmatpush.bf16.xpose.msra.mxu0 0
  %235 = vmatpush.bf16.xpose.msra.mxu0 0
  %236 = vmatpush.bf16.xpose.msra.mxu0 0
  %237 = vmatpush.bf16.xpose.msra.mxu0 0
  %238 = vmatpush.bf16.xpose.msra.mxu0 0
  %239 = vmatpush.bf16.xpose.msra.mxu0 0
  %240 = vmatpush.bf16.xpose.msra.mxu0 %v231
  %241 = vmatmul.bf16.gmra.mxu0 %v228
  %v242 = vpop.f32.mrf.mxu0
  %v243 = vadd.f32 0.0, %v242
  %v244 = vpop.f32.mrf.mxu0
  %245 = vdwg.mxu0
  %v246 = vmul.f32 %v123, 0.17677669
  %v247 = vmul.f32 %v147, 0.17677669
  %v248 = vmul.f32 %v171, 0.17677669
  %v249 = vmul.f32 %v195, 0.17677669
  %v250 = vmul.f32 %v219, 0.17677669
  %v251 = vmul.f32 %v243, 0.17677669
  %vm252 = vcmp.gt.f32.partialorder %v101, 0.0
  %v253 = vsel %vm252, 1, 0
  %v254 = vrot.slane %v253, 1
  %v255 = vrot.slane %v253, 2
  %v256 = vrot.slane %v253, 3
  %v257 = vrot.slane %v253, 4
  %v258 = vrot.slane %v253, 5
  %vm259 = vcmp.ne.s32.totalorder %v254, 0
  %vm260 = vcmp.ne.s32.totalorder %v255, 0
  %vm261 = vcmp.ne.s32.totalorder %v256, 0
  %vm262 = vcmp.ne.s32.totalorder %v257, 0
  %vm263 = vcmp.ne.s32.totalorder %v258, 0
  %v264 = vsel %vm259, 1, 0
  %v265 = vsel %vm260, 1, 0
  %v266 = vsel %vm261, 1, 0
  %v267 = vsel %vm262, 1, 0
  %v268 = vsel %vm263, 1, 0
  %v269 = vperm.slane %v253, 0
  %v270 = vperm.slane %v264, 0
  %v271 = vperm.slane %v265, 0
  %v272 = vperm.slane %v266, 0
  %v273 = vperm.slane %v267, 0
  %v274 = vperm.slane %v268, 0
  %vm275 = vcmp.eq.s32.totalorder %v269, 1
  %vm276 = vcmp.eq.s32.totalorder %v270, 1
  %vm277 = vcmp.eq.s32.totalorder %v271, 1
  %vm278 = vcmp.eq.s32.totalorder %v272, 1
  %vm279 = vcmp.eq.s32.totalorder %v273, 1
  %vm280 = vcmp.eq.s32.totalorder %v274, 1
  %v281 = vsel %vm275, %v246, -1e+09
  %v282 = vsel %vm276, %v247, -1e+09
  %v283 = vsel %vm277, %v248, -1e+09
  %v284 = vsel %vm278, %v249, -1e+09
  %v285 = vsel %vm279, %v250, -1e+09
  %v286 = vsel %vm280, %v251, -1e+09
  %vm287 = vcmask 64512
  %v288 = vsel %vm287, %v281, -inf
  %289 = vmax.xlane.f32.xlu0 %v288
  %v290 = vpop.xlane.xlu0 %289
  %v291 = vsel %vm287, %v282, -inf
  %292 = vmax.xlane.f32.xlu0 %v291
  %v293 = vpop.xlane.xlu0 %292
  %v294 = vsel %vm287, %v283, -inf
  %295 = vmax.xlane.f32.xlu0 %v294
  %v296 = vpop.xlane.xlu0 %295
  %v297 = vsel %vm287, %v284, -inf
  %298 = vmax.xlane.f32.xlu0 %v297
  %v299 = vpop.xlane.xlu0 %298
  %v300 = vsel %vm287, %v285, -inf
  %301 = vmax.xlane.f32.xlu0 %v300
  %v302 = vpop.xlane.xlu0 %301
  %v303 = vsel %vm287, %v286, -inf
  %304 = vmax.xlane.f32.xlu0 %v303
  %v305 = vpop.xlane.xlu0 %304
  %v306 = vsub.f32 %v281, %v290
  %v307 = vsub.f32 %v282, %v293
  %v308 = vsub.f32 %v283, %v296
  %v309 = vsub.f32 %v284, %v299
  %v310 = vsub.f32 %v285, %v302
  %v311 = vsub.f32 %v286, %v305
  %v312 = vmul.f32 %v306, 1.442695
  %v313 = vpow.pop %v312
  %v314 = vmul.f32 %v307, 1.442695
  %v315 = vpow.pop %v314
  %v316 = vmul.f32 %v308, 1.442695
  %v317 = vpow.pop %v316
  %v318 = vmul.f32 %v309, 1.442695
  %v319 = vpow.pop %v318
  %v320 = vmul.f32 %v310, 1.442695
  %v321 = vpow.pop %v320
  %v322 = vmul.f32 %v311, 1.442695
  %v323 = vpow.pop %v322
  %v324 = vsel %vm287, %v313, 0.0
  %325 = vadd.xlane.f32.xlu0 %v324
  %v326 = vpop.xlane.xlu0 %325
  %v327 = vsel %vm287, %v315, 0.0
  %328 = vadd.xlane.f32.xlu0 %v327
  %v329 = vpop.xlane.xlu0 %328
  %v330 = vsel %vm287, %v317, 0.0
  %331 = vadd.xlane.f32.xlu0 %v330
  %v332 = vpop.xlane.xlu0 %331
  %v333 = vsel %vm287, %v319, 0.0
  %334 = vadd.xlane.f32.xlu0 %v333
  %v335 = vpop.xlane.xlu0 %334
  %v336 = vsel %vm287, %v321, 0.0
  %337 = vadd.xlane.f32.xlu0 %v336
  %v338 = vpop.xlane.xlu0 %337
  %v339 = vsel %vm287, %v323, 0.0
  %340 = vadd.xlane.f32.xlu0 %v339
  %v341 = vpop.xlane.xlu0 %340
  %v342 = vrcp.pop %v326
  %v343 = vrcp.pop %v329
  %v344 = vrcp.pop %v332
  %v345 = vrcp.pop %v335
  %v346 = vrcp.pop %v338
  %v347 = vrcp.pop %v341
  %v348 = vmul.f32 %v313, %v342
  %v349 = vmul.f32 %v315, %v343
  %v350 = vmul.f32 %v317, %v344
  %v351 = vmul.f32 %v319, %v345
  %v352 = vmul.f32 %v321, %v346
  %v353 = vmul.f32 %v323, %v347
  %v354 = vpack.c.bf16 %v348, %v348
  %v355 = vpack.c.bf16 %v349, %v349
  %v356 = vpack.c.bf16 %v350, %v350
  %v357 = vpack.c.bf16 %v351, %v351
  %v358 = vpack.c.bf16 %v352, %v352
  %v359 = vpack.c.bf16 %v353, %v353
  %360 = vrot.lane.b32.xlu0 %v104, 64
  %v361 = vpop.permute.xlu0 %360
  %v363 = vsel %vm287, %v354, 0
  %vm365 = vcmask 1043456
  %v367 = vsel %vm365, %v361, 0
  %369 = vmatpush.bf16.msra.mxu0 0
  %370 = vmatpush.bf16.msra.mxu0 0
  %371 = vmatpush.bf16.msra.mxu0 0
  %372 = vmatpush.bf16.msra.mxu0 0
  %373 = vmatpush.bf16.msra.mxu0 0
  %374 = vmatpush.bf16.msra.mxu0 0
  %375 = vmatpush.bf16.msra.mxu0 0
  %376 = vmatpush.bf16.msra.mxu0 %v367
  %377 = vmatmul.bf16.gmra.mxu0 %v363
  %v378 = vpop.f32.mrf.mxu0
  %v379 = vadd.f32 0.0, %v378
  %v380 = vpop.f32.mrf.mxu0
  %381 = vdwg.mxu0
  %382 = vrot.lane.b32.xlu0 %v128, 64
  %v383 = vpop.permute.xlu0 %382
  %v385 = vsel %vm287, %v355, 0
  %v388 = vsel %vm365, %v383, 0
  %390 = vmatpush.bf16.msra.mxu0 0
  %391 = vmatpush.bf16.msra.mxu0 0
  %392 = vmatpush.bf16.msra.mxu0 0
  %393 = vmatpush.bf16.msra.mxu0 0
  %394 = vmatpush.bf16.msra.mxu0 0
  %395 = vmatpush.bf16.msra.mxu0 0
  %396 = vmatpush.bf16.msra.mxu0 0
  %397 = vmatpush.bf16.msra.mxu0 %v388
  %398 = vmatmul.bf16.gmra.mxu0 %v385
  %v399 = vpop.f32.mrf.mxu0
  %v400 = vadd.f32 0.0, %v399
  %v401 = vpop.f32.mrf.mxu0
  %402 = vdwg.mxu0
  %403 = vrot.lane.b32.xlu0 %v152, 64
  %v404 = vpop.permute.xlu0 %403
  %v406 = vsel %vm287, %v356, 0
  %v409 = vsel %vm365, %v404, 0
  %411 = vmatpush.bf16.msra.mxu0 0
  %412 = vmatpush.bf16.msra.mxu0 0
  %413 = vmatpush.bf16.msra.mxu0 0
  %414 = vmatpush.bf16.msra.mxu0 0
  %415 = vmatpush.bf16.msra.mxu0 0
  %416 = vmatpush.bf16.msra.mxu0 0
  %417 = vmatpush.bf16.msra.mxu0 0
  %418 = vmatpush.bf16.msra.mxu0 %v409
  %419 = vmatmul.bf16.gmra.mxu0 %v406
  %v420 = vpop.f32.mrf.mxu0
  %v421 = vadd.f32 0.0, %v420
  %v422 = vpop.f32.mrf.mxu0
  %423 = vdwg.mxu0
  %424 = vrot.lane.b32.xlu0 %v176, 64
  %v425 = vpop.permute.xlu0 %424
  %v427 = vsel %vm287, %v357, 0
  %v430 = vsel %vm365, %v425, 0
  %432 = vmatpush.bf16.msra.mxu0 0
  %433 = vmatpush.bf16.msra.mxu0 0
  %434 = vmatpush.bf16.msra.mxu0 0
  %435 = vmatpush.bf16.msra.mxu0 0
  %436 = vmatpush.bf16.msra.mxu0 0
  %437 = vmatpush.bf16.msra.mxu0 0
  %438 = vmatpush.bf16.msra.mxu0 0
  %439 = vmatpush.bf16.msra.mxu0 %v430
  %440 = vmatmul.bf16.gmra.mxu0 %v427
  %v441 = vpop.f32.mrf.mxu0
  %v442 = vadd.f32 0.0, %v441
  %v443 = vpop.f32.mrf.mxu0
  %444 = vdwg.mxu0
  %445 = vrot.lane.b32.xlu0 %v200, 64
  %v446 = vpop.permute.xlu0 %445
  %v448 = vsel %vm287, %v358, 0
  %v451 = vsel %vm365, %v446, 0
  %453 = vmatpush.bf16.msra.mxu0 0
  %454 = vmatpush.bf16.msra.mxu0 0
  %455 = vmatpush.bf16.msra.mxu0 0
  %456 = vmatpush.bf16.msra.mxu0 0
  %457 = vmatpush.bf16.msra.mxu0 0
  %458 = vmatpush.bf16.msra.mxu0 0
  %459 = vmatpush.bf16.msra.mxu0 0
  %460 = vmatpush.bf16.msra.mxu0 %v451
  %461 = vmatmul.bf16.gmra.mxu0 %v448
  %v462 = vpop.f32.mrf.mxu0
  %v463 = vadd.f32 0.0, %v462
  %v464 = vpop.f32.mrf.mxu0
  %465 = vdwg.mxu0
  %466 = vrot.lane.b32.xlu0 %v224, 64
  %v467 = vpop.permute.xlu0 %466
  %v469 = vsel %vm287, %v359, 0
  %v472 = vsel %vm365, %v467, 0
  %474 = vmatpush.bf16.msra.mxu0 0
  %475 = vmatpush.bf16.msra.mxu0 0
  %476 = vmatpush.bf16.msra.mxu0 0
  %477 = vmatpush.bf16.msra.mxu0 0
  %478 = vmatpush.bf16.msra.mxu0 0
  %479 = vmatpush.bf16.msra.mxu0 0
  %480 = vmatpush.bf16.msra.mxu0 0
  %481 = vmatpush.bf16.msra.mxu0 %v472
  %482 = vmatmul.bf16.gmra.mxu0 %v469
  %v483 = vpop.f32.mrf.mxu0
  %v484 = vadd.f32 0.0, %v483
  %v485 = vpop.f32.mrf.mxu0
  %486 = vdwg.mxu0
  %v487 = vpack.c.bf16 %v400, %v379
  %v488 = vpack.c.bf16 %v442, %v421
  %v489 = vpack.c.bf16 %v484, %v463
  %v490 = vld [vmem:[%s2] sm:$0xf]
  %v491 = vld [vmem:[%s2 + $0x8] sm:$0xf]
  %v492 = vld [vmem:[%s2 + $0x10] sm:$0xf]
  %v493 = vld [vmem:[%s2 + $0x18] sm:$0xf]
  %v498 = vunpack.c.l.b16 %v490
  %v499 = vunpack.c.l.b16 %v491
  %v500 = vunpack.c.l.b16 %v492
  %v501 = vunpack.c.l.b16 %v493
  %v502 = vpack.c.b16 %v499, %v498
  %v503 = vpack.c.b16 %v501, %v500
  %504 = vrot.lane.b32.xlu0 %v502, 32
  %v505 = vpop.permute.xlu0 %504
  %506 = vrot.lane.b32.xlu0 %v503, 32
  %v507 = vpop.permute.xlu0 %506
  %v511 = vsel %vm61, %v487, 0
  %v514 = vsel %vm61, %v488, 0
  %v517 = vsel %vm61, %v489, 0
  %519 = vmatpush.bf16.msra.mxu0 0
  %520 = vmatpush.bf16.msra.mxu0 0
  %521 = vmatpush.bf16.msra.mxu0 0
  %522 = vmatpush.bf16.msra.mxu0 0
  %523 = vmatpush.bf16.msra.mxu0 0
  %524 = vmatpush.bf16.msra.mxu0 0
  %525 = vmatpush.bf16.msra.mxu0 %v507
  %526 = vmatpush.bf16.msra.mxu0 %v505
  %527 = vmatmul.bf16.gmra.mxu0 %v511
  %v528 = vpop.f32.mrf.mxu0
  %v529 = vadd.f32 0.0, %v528
  %v530 = vpop.f32.mrf.mxu0
  %v531 = vadd.f32 0.0, %v530
  %532 = vmatmul.bf16.gmra.mxu0 %v514
  %v533 = vpop.f32.mrf.mxu0
  %v534 = vadd.f32 0.0, %v533
  %v535 = vpop.f32.mrf.mxu0
  %v536 = vadd.f32 0.0, %v535
  %537 = vmatmul.bf16.gmra.mxu0 %v517
  %v538 = vpop.f32.mrf.mxu0
  %v539 = vadd.f32 0.0, %v538
  %v540 = vpop.f32.mrf.mxu0
  %v541 = vadd.f32 0.0, %v540
  %542 = vdwg.mxu0
  %v543 = vadd.f32 %v24, %v529
  %v544 = vadd.f32 %v25, %v531
  %v545 = vadd.f32 %v26, %v534
  %v546 = vadd.f32 %v27, %v536
  %v547 = vadd.f32 %v28, %v539
  %v548 = vadd.f32 %v29, %v541
  %v549 = vld [vmem:[%s3] sm:$0x1]
  %v550 = vld [vmem:[%s3 + $0x1] sm:$0x1]
  %v551 = vsel %vm61, %v543, 0.0
  %552 = vadd.xlane.f32.xlu0 %v551
  %v553 = vpop.xlane.xlu0 %552
  %v554 = vsel %vm61, %v544, 0.0
  %555 = vadd.xlane.f32.xlu0 %v554
  %v556 = vpop.xlane.xlu0 %555
  %v557 = vsel %vm61, %v545, 0.0
  %558 = vadd.xlane.f32.xlu0 %v557
  %v559 = vpop.xlane.xlu0 %558
  %v560 = vsel %vm61, %v546, 0.0
  %561 = vadd.xlane.f32.xlu0 %v560
  %v562 = vpop.xlane.xlu0 %561
  %v563 = vsel %vm61, %v547, 0.0
  %564 = vadd.xlane.f32.xlu0 %v563
  %v565 = vpop.xlane.xlu0 %564
  %v566 = vsel %vm61, %v548, 0.0
  %567 = vadd.xlane.f32.xlu0 %v566
  %v568 = vpop.xlane.xlu0 %567
  %v569 = vrcp.pop 32.0
  %v570 = vmul.f32 32.0, %v569
  %v571 = vsub.f32 1.0, %v570
  %v572 = vmul.f32 %v569, %v571
  %v573 = vadd.f32 %v569, %v572
  %vm574 = vweird.f32 %v569
  %v575 = vsel %vm574, %v569, %v573
  %v576 = vmul.f32 %v553, %v575
  %v577 = vmul.f32 %v556, %v575
  %v578 = vmul.f32 %v559, %v575
  %v579 = vmul.f32 %v562, %v575
  %v580 = vmul.f32 %v565, %v575
  %v581 = vmul.f32 %v568, %v575
  %v582 = vsub.f32 %v543, %v576
  %v583 = vsub.f32 %v544, %v577
  %v584 = vsub.f32 %v545, %v578
  %v585 = vsub.f32 %v546, %v579
  %v586 = vsub.f32 %v547, %v580
  %v587 = vsub.f32 %v548, %v581
  %v588 = vmul.f32 %v582, %v582
  %v589 = vmul.f32 %v583, %v583
  %v590 = vmul.f32 %v584, %v584
  %v591 = vmul.f32 %v585, %v585
  %v592 = vmul.f32 %v586, %v586
  %v593 = vmul.f32 %v587, %v587
  %v594 = vsel %vm61, %v588, 0.0
  %595 = vadd.xlane.f32.xlu0 %v594
  %v596 = vpop.xlane.xlu0 %595
  %v597 = vsel %vm61, %v589, 0.0
  %598 = vadd.xlane.f32.xlu0 %v597
  %v599 = vpop.xlane.xlu0 %598
  %v600 = vsel %vm61, %v590, 0.0
  %601 = vadd.xlane.f32.xlu0 %v600
  %v602 = vpop.xlane.xlu0 %601
  %v603 = vsel %vm61, %v591, 0.0
  %604 = vadd.xlane.f32.xlu0 %v603
  %v605 = vpop.xlane.xlu0 %604
  %v606 = vsel %vm61, %v592, 0.0
  %607 = vadd.xlane.f32.xlu0 %v606
  %v608 = vpop.xlane.xlu0 %607
  %v609 = vsel %vm61, %v593, 0.0
  %610 = vadd.xlane.f32.xlu0 %v609
  %v611 = vpop.xlane.xlu0 %610
  %v612 = vmul.f32 %v596, %v575
  %v613 = vmul.f32 %v599, %v575
  %v614 = vmul.f32 %v602, %v575
  %v615 = vmul.f32 %v605, %v575
  %v616 = vmul.f32 %v608, %v575
  %v617 = vmul.f32 %v611, %v575
  %v618 = vadd.f32 %v612, 1e-05
  %v619 = vadd.f32 %v613, 1e-05
  %v620 = vadd.f32 %v614, 1e-05
  %v621 = vadd.f32 %v615, 1e-05
  %v622 = vadd.f32 %v616, 1e-05
  %v623 = vadd.f32 %v617, 1e-05
  %v624 = vrsqrt.pop %v618
  %v625 = vmul.f32 %v624, %v618
  %v626 = vmul.f32 %v625, %v624
  %v627 = vmul.f32 0.5, %v626
  %v628 = vsub.f32 1.5, %v627
  %v629 = vmul.f32 %v624, %v628
  %vm630 = vweird.f32 %v618
  %vm631 = vweird.f32 %v624
  %vm632 = vmor %vm630, %vm631
  %v633 = vsel %vm632, %v624, %v629
  %v634 = vrsqrt.pop %v619
  %v635 = vmul.f32 %v634, %v619
  %v636 = vmul.f32 %v635, %v634
  %v637 = vmul.f32 0.5, %v636
  %v638 = vsub.f32 1.5, %v637
  %v639 = vmul.f32 %v634, %v638
  %vm640 = vweird.f32 %v619
  %vm641 = vweird.f32 %v634
  %vm642 = vmor %vm640, %vm641
  %v643 = vsel %vm642, %v634, %v639
  %v644 = vrsqrt.pop %v620
  %v645 = vmul.f32 %v644, %v620
  %v646 = vmul.f32 %v645, %v644
  %v647 = vmul.f32 0.5, %v646
  %v648 = vsub.f32 1.5, %v647
  %v649 = vmul.f32 %v644, %v648
  %vm650 = vweird.f32 %v620
  %vm651 = vweird.f32 %v644
  %vm652 = vmor %vm650, %vm651
  %v653 = vsel %vm652, %v644, %v649
  %v654 = vrsqrt.pop %v621
  %v655 = vmul.f32 %v654, %v621
  %v656 = vmul.f32 %v655, %v654
  %v657 = vmul.f32 0.5, %v656
  %v658 = vsub.f32 1.5, %v657
  %v659 = vmul.f32 %v654, %v658
  %vm660 = vweird.f32 %v621
  %vm661 = vweird.f32 %v654
  %vm662 = vmor %vm660, %vm661
  %v663 = vsel %vm662, %v654, %v659
  %v664 = vrsqrt.pop %v622
  %v665 = vmul.f32 %v664, %v622
  %v666 = vmul.f32 %v665, %v664
  %v667 = vmul.f32 0.5, %v666
  %v668 = vsub.f32 1.5, %v667
  %v669 = vmul.f32 %v664, %v668
  %vm670 = vweird.f32 %v622
  %vm671 = vweird.f32 %v664
  %vm672 = vmor %vm670, %vm671
  %v673 = vsel %vm672, %v664, %v669
  %v674 = vrsqrt.pop %v623
  %v675 = vmul.f32 %v674, %v623
  %v676 = vmul.f32 %v675, %v674
  %v677 = vmul.f32 0.5, %v676
  %v678 = vsub.f32 1.5, %v677
  %v679 = vmul.f32 %v674, %v678
  %vm680 = vweird.f32 %v623
  %vm681 = vweird.f32 %v674
  %vm682 = vmor %vm680, %vm681
  %v683 = vsel %vm682, %v674, %v679
  %v684 = vmul.f32 %v582, %v633
  %v685 = vmul.f32 %v583, %v643
  %v686 = vmul.f32 %v584, %v653
  %v687 = vmul.f32 %v585, %v663
  %v688 = vmul.f32 %v586, %v673
  %v689 = vmul.f32 %v587, %v683
  %v690 = vperm.slane %v549, 0
  %v691 = vmul.f32 %v684, %v690
  %v692 = vmul.f32 %v685, %v690
  %v693 = vmul.f32 %v686, %v690
  %v694 = vmul.f32 %v687, %v690
  %v695 = vmul.f32 %v688, %v690
  %v696 = vmul.f32 %v689, %v690
  %v697 = vperm.slane %v550, 0
  %v698 = vadd.f32 %v691, %v697
  %v699 = vadd.f32 %v692, %v697
  %v700 = vadd.f32 %v693, %v697
  %v701 = vadd.f32 %v694, %v697
  %v702 = vadd.f32 %v695, %v697
  %v703 = vadd.f32 %v696, %v697
  %v704 = vpack.c.bf16 %v699, %v698
  %v705 = vpack.c.bf16 %v701, %v700
  %v706 = vpack.c.bf16 %v703, %v702
  %v707 = vld [vmem:[%s2 + $0x4] sm:$0xf]
  %v708 = vld [vmem:[%s2 + $0xc] sm:$0xf]
  %v709 = vld [vmem:[%s2 + $0x14] sm:$0xf]
  %v710 = vld [vmem:[%s2 + $0x1c] sm:$0xf]
  %v715 = vunpack.c.l.b16 %v707
  %v716 = vunpack.c.l.b16 %v708
  %v717 = vunpack.c.l.b16 %v709
  %v718 = vunpack.c.l.b16 %v710
  %v719 = vpack.c.b16 %v716, %v715
  %v720 = vpack.c.b16 %v718, %v717
  %v724 = vsel %vm61, %v704, 0
  %v727 = vsel %vm61, %v705, 0
  %v730 = vsel %vm61, %v706, 0
  %732 = vmatpush.bf16.msra.mxu0 0
  %733 = vmatpush.bf16.msra.mxu0 0
  %734 = vmatpush.bf16.msra.mxu0 0
  %735 = vmatpush.bf16.msra.mxu0 0
  %736 = vmatpush.bf16.msra.mxu0 0
  %737 = vmatpush.bf16.msra.mxu0 0
  %738 = vmatpush.bf16.msra.mxu0 %v720
  %739 = vmatpush.bf16.msra.mxu0 %v719
  %740 = vmatmul.bf16.gmra.mxu0 %v724
  %v741 = vpop.f32.mrf.mxu0
  %v742 = vadd.f32 0.0, %v741
  %v743 = vpop.f32.mrf.mxu0
  %v744 = vadd.f32 0.0, %v743
  %745 = vmatmul.bf16.gmra.mxu0 %v727
  %v746 = vpop.f32.mrf.mxu0
  %v747 = vadd.f32 0.0, %v746
  %v748 = vpop.f32.mrf.mxu0
  %v749 = vadd.f32 0.0, %v748
  %750 = vmatmul.bf16.gmra.mxu0 %v730
  %v751 = vpop.f32.mrf.mxu0
  %v752 = vadd.f32 0.0, %v751
  %v753 = vpop.f32.mrf.mxu0
  %v754 = vadd.f32 0.0, %v753
  %755 = vdwg.mxu0
  %v756 = vmul.f32 %v742, %v742
  %v757 = vmul.f32 %v744, %v744
  %v758 = vmul.f32 %v747, %v747
  %v759 = vmul.f32 %v749, %v749
  %v760 = vmul.f32 %v752, %v752
  %v761 = vmul.f32 %v754, %v754
  %v762 = vmul.f32 %v742, %v756
  %v763 = vmul.f32 %v744, %v757
  %v764 = vmul.f32 %v747, %v758
  %v765 = vmul.f32 %v749, %v759
  %v766 = vmul.f32 %v752, %v760
  %v767 = vmul.f32 %v754, %v761
  %v768 = vmul.f32 %v762, 0.044715
  %v769 = vmul.f32 %v763, 0.044715
  %v770 = vmul.f32 %v764, 0.044715
  %v771 = vmul.f32 %v765, 0.044715
  %v772 = vmul.f32 %v766, 0.044715
  %v773 = vmul.f32 %v767, 0.044715
  %v774 = vadd.f32 %v742, %v768
  %v775 = vadd.f32 %v744, %v769
  %v776 = vadd.f32 %v747, %v770
  %v777 = vadd.f32 %v749, %v771
  %v778 = vadd.f32 %v752, %v772
  %v779 = vadd.f32 %v754, %v773
  %v780 = vmul.f32 %v774, 0.7978846
  %v781 = vmul.f32 %v775, 0.7978846
  %v782 = vmul.f32 %v776, 0.7978846
  %v783 = vmul.f32 %v777, 0.7978846
  %v784 = vmul.f32 %v778, 0.7978846
  %v785 = vmul.f32 %v779, 0.7978846
  %v786 = vtanh.pop %v780
  %v787 = vtanh.pop %v781
  %v788 = vtanh.pop %v782
  %v789 = vtanh.pop %v783
  %v790 = vtanh.pop %v784
  %v791 = vtanh.pop %v785
  %v792 = vadd.f32 %v786, 1.0
  %v793 = vadd.f32 %v787, 1.0
  %v794 = vadd.f32 %v788, 1.0
  %v795 = vadd.f32 %v789, 1.0
  %v796 = vadd.f32 %v790, 1.0
  %v797 = vadd.f32 %v791, 1.0
  %v798 = vmul.f32 %v792, 0.5
  %v799 = vmul.f32 %v793, 0.5
  %v800 = vmul.f32 %v794, 0.5
  %v801 = vmul.f32 %v795, 0.5
  %v802 = vmul.f32 %v796, 0.5
  %v803 = vmul.f32 %v797, 0.5
  %v804 = vmul.f32 %v742, %v798
  %v805 = vmul.f32 %v744, %v799
  %v806 = vmul.f32 %v747, %v800
  %v807 = vmul.f32 %v749, %v801
  %v808 = vmul.f32 %v752, %v802
  %v809 = vmul.f32 %v754, %v803
  %v810 = vpack.c.bf16 %v805, %v804
  %v811 = vpack.c.bf16 %v807, %v806
  %v812 = vpack.c.bf16 %v809, %v808
  %813 = vrot.lane.b32.xlu0 %v719, 64
  %v814 = vpop.permute.xlu0 %813
  %815 = vrot.lane.b32.xlu0 %v720, 64
  %v816 = vpop.permute.xlu0 %815
  %vm817 = vcmask 523264
  %v819 = vsel %vm817, %v810, 0
  %v822 = vsel %vm817, %v811, 0
  %v825 = vsel %vm817, %v812, 0
  %v828 = vsel %vm817, %v814, 0
  %v831 = vsel %vm817, %v816, 0
  %833 = vmatpush.bf16.xpose.msra.mxu0 0
  %834 = vmatpush.bf16.xpose.msra.mxu0 0
  %835 = vmatpush.bf16.xpose.msra.mxu0 0
  %836 = vmatpush.bf16.xpose.msra.mxu0 0
  %837 = vmatpush.bf16.xpose.msra.mxu0 0
  %838 = vmatpush.bf16.xpose.msra.mxu0 0
  %839 = vmatpush.bf16.xpose.msra.mxu0 %v831
  %840 = vmatpush.bf16.xpose.msra.mxu0 %v828
  %841 = vmatmul.bf16.gmra.mxu0 %v819
  %v842 = vpop.f32.mrf.mxu0
  %v843 = vadd.f32 0.0, %v842
  %v844 = vpop.f32.mrf.mxu0
  %v845 = vadd.f32 0.0, %v844
  %846 = vmatmul.bf16.gmra.mxu0 %v822
  %v847 = vpop.f32.mrf.mxu0
  %v848 = vadd.f32 0.0, %v847
  %v849 = vpop.f32.mrf.mxu0
  %v850 = vadd.f32 0.0, %v849
  %851 = vmatmul.bf16.gmra.mxu0 %v825
  %v852 = vpop.f32.mrf.mxu0
  %v853 = vadd.f32 0.0, %v852
  %v854 = vpop.f32.mrf.mxu0
  %v855 = vadd.f32 0.0, %v854
  %856 = vdwg.mxu0
  %v857 = vadd.f32 %v698, %v843
  %v858 = vadd.f32 %v699, %v845
  %v859 = vadd.f32 %v700, %v848
  %v860 = vadd.f32 %v701, %v850
  %v861 = vadd.f32 %v702, %v853
  %v862 = vadd.f32 %v703, %v855
  %v863 = vld [vmem:[%s3 + $0x2] sm:$0x1]
  %v864 = vld [vmem:[%s3 + $0x3] sm:$0x1]
  %v865 = vsel %vm61, %v857, 0.0
  %866 = vadd.xlane.f32.xlu0 %v865
  %v867 = vpop.xlane.xlu0 %866
  %v868 = vsel %vm61, %v858, 0.0
  %869 = vadd.xlane.f32.xlu0 %v868
  %v870 = vpop.xlane.xlu0 %869
  %v871 = vsel %vm61, %v859, 0.0
  %872 = vadd.xlane.f32.xlu0 %v871
  %v873 = vpop.xlane.xlu0 %872
  %v874 = vsel %vm61, %v860, 0.0
  %875 = vadd.xlane.f32.xlu0 %v874
  %v876 = vpop.xlane.xlu0 %875
  %v877 = vsel %vm61, %v861, 0.0
  %878 = vadd.xlane.f32.xlu0 %v877
  %v879 = vpop.xlane.xlu0 %878
  %v880 = vsel %vm61, %v862, 0.0
  %881 = vadd.xlane.f32.xlu0 %v880
  %v882 = vpop.xlane.xlu0 %881
  %v883 = vmul.f32 %v867, %v575
  %v884 = vmul.f32 %v870, %v575
  %v885 = vmul.f32 %v873, %v575
  %v886 = vmul.f32 %v876, %v575
  %v887 = vmul.f32 %v879, %v575
  %v888 = vmul.f32 %v882, %v575
  %v889 = vsub.f32 %v857, %v883
  %v890 = vsub.f32 %v858, %v884
  %v891 = vsub.f32 %v859, %v885
  %v892 = vsub.f32 %v860, %v886
  %v893 = vsub.f32 %v861, %v887
  %v894 = vsub.f32 %v862, %v888
  %v895 = vmul.f32 %v889, %v889
  %v896 = vmul.f32 %v890, %v890
  %v897 = vmul.f32 %v891, %v891
  %v898 = vmul.f32 %v892, %v892
  %v899 = vmul.f32 %v893, %v893
  %v900 = vmul.f32 %v894, %v894
  %v901 = vsel %vm61, %v895, 0.0
  %902 = vadd.xlane.f32.xlu0 %v901
  %v903 = vpop.xlane.xlu0 %902
  %v904 = vsel %vm61, %v896, 0.0
  %905 = vadd.xlane.f32.xlu0 %v904
  %v906 = vpop.xlane.xlu0 %905
  %v907 = vsel %vm61, %v897, 0.0
  %908 = vadd.xlane.f32.xlu0 %v907
  %v909 = vpop.xlane.xlu0 %908
  %v910 = vsel %vm61, %v898, 0.0
  %911 = vadd.xlane.f32.xlu0 %v910
  %v912 = vpop.xlane.xlu0 %911
  %v913 = vsel %vm61, %v899, 0.0
  %914 = vadd.xlane.f32.xlu0 %v913
  %v915 = vpop.xlane.xlu0 %914
  %v916 = vsel %vm61, %v900, 0.0
  %917 = vadd.xlane.f32.xlu0 %v916
  %v918 = vpop.xlane.xlu0 %917
  %v919 = vmul.f32 %v903, %v575
  %v920 = vmul.f32 %v906, %v575
  %v921 = vmul.f32 %v909, %v575
  %v922 = vmul.f32 %v912, %v575
  %v923 = vmul.f32 %v915, %v575
  %v924 = vmul.f32 %v918, %v575
  %v925 = vadd.f32 %v919, 1e-05
  %v926 = vadd.f32 %v920, 1e-05
  %v927 = vadd.f32 %v921, 1e-05
  %v928 = vadd.f32 %v922, 1e-05
  %v929 = vadd.f32 %v923, 1e-05
  %v930 = vadd.f32 %v924, 1e-05
  %v931 = vrsqrt.pop %v925
  %v932 = vmul.f32 %v931, %v925
  %v933 = vmul.f32 %v932, %v931
  %v934 = vmul.f32 0.5, %v933
  %v935 = vsub.f32 1.5, %v934
  %v936 = vmul.f32 %v931, %v935
  %vm937 = vweird.f32 %v925
  %vm938 = vweird.f32 %v931
  %vm939 = vmor %vm937, %vm938
  %v940 = vsel %vm939, %v931, %v936
  %v941 = vrsqrt.pop %v926
  %v942 = vmul.f32 %v941, %v926
  %v943 = vmul.f32 %v942, %v941
  %v944 = vmul.f32 0.5, %v943
  %v945 = vsub.f32 1.5, %v944
  %v946 = vmul.f32 %v941, %v945
  %vm947 = vweird.f32 %v926
  %vm948 = vweird.f32 %v941
  %vm949 = vmor %vm947, %vm948
  %v950 = vsel %vm949, %v941, %v946
  %v951 = vrsqrt.pop %v927
  %v952 = vmul.f32 %v951, %v927
  %v953 = vmul.f32 %v952, %v951
  %v954 = vmul.f32 0.5, %v953
  %v955 = vsub.f32 1.5, %v954
  %v956 = vmul.f32 %v951, %v955
  %vm957 = vweird.f32 %v927
  %vm958 = vweird.f32 %v951
  %vm959 = vmor %vm957, %vm958
  %v960 = vsel %vm959, %v951, %v956
  %v961 = vrsqrt.pop %v928
  %v962 = vmul.f32 %v961, %v928
  %v963 = vmul.f32 %v962, %v961
  %v964 = vmul.f32 0.5, %v963
  %v965 = vsub.f32 1.5, %v964
  %v966 = vmul.f32 %v961, %v965
  %vm967 = vweird.f32 %v928
  %vm968 = vweird.f32 %v961
  %vm969 = vmor %vm967, %vm968
  %v970 = vsel %vm969, %v961, %v966
  %v971 = vrsqrt.pop %v929
  %v972 = vmul.f32 %v971, %v929
  %v973 = vmul.f32 %v972, %v971
  %v974 = vmul.f32 0.5, %v973
  %v975 = vsub.f32 1.5, %v974
  %v976 = vmul.f32 %v971, %v975
  %vm977 = vweird.f32 %v929
  %vm978 = vweird.f32 %v971
  %vm979 = vmor %vm977, %vm978
  %v980 = vsel %vm979, %v971, %v976
  %v981 = vrsqrt.pop %v930
  %v982 = vmul.f32 %v981, %v930
  %v983 = vmul.f32 %v982, %v981
  %v984 = vmul.f32 0.5, %v983
  %v985 = vsub.f32 1.5, %v984
  %v986 = vmul.f32 %v981, %v985
  %vm987 = vweird.f32 %v930
  %vm988 = vweird.f32 %v981
  %vm989 = vmor %vm987, %vm988
  %v990 = vsel %vm989, %v981, %v986
  %v991 = vmul.f32 %v889, %v940
  %v992 = vmul.f32 %v890, %v950
  %v993 = vmul.f32 %v891, %v960
  %v994 = vmul.f32 %v892, %v970
  %v995 = vmul.f32 %v893, %v980
  %v996 = vmul.f32 %v894, %v990
  %v997 = vperm.slane %v863, 0
  %v998 = vmul.f32 %v991, %v997
  %v999 = vmul.f32 %v992, %v997
  %v1000 = vmul.f32 %v993, %v997
  %v1001 = vmul.f32 %v994, %v997
  %v1002 = vmul.f32 %v995, %v997
  %v1003 = vmul.f32 %v996, %v997
  %v1004 = vperm.slane %v864, 0
  %v1005 = vadd.f32 %v998, %v1004
  %v1006 = vadd.f32 %v999, %v1004
  %v1007 = vadd.f32 %v1000, %v1004
  %v1008 = vadd.f32 %v1001, %v1004
  %v1009 = vadd.f32 %v1002, %v1004
  %v1010 = vadd.f32 %v1003, %v1004
  %v1011 = vld [vmem:[%s1] sm:$0x3f]
  %v1012 = vperm.slane %v1011, 0
  %v1013 = vlaneseq
  %v1014 = vshrl.u32 %v1013, 7
  %v1015 = vadd.s32 %v1014, 8
  %1016 = vset.pattern.permute.xlu0 %v1015
  %1017 = vperm.xlu0 %1016, %v1012
  %v1018 = vpop.permute.xlu0 %1017
  %v1019 = vperm.slane %v1011, 1
  %v1020 = vlaneseq
  %v1021 = vshrl.u32 %v1020, 7
  %v1022 = vadd.s32 %v1021, 8
  %1023 = vset.pattern.permute.xlu0 %v1022
  %1024 = vperm.xlu0 %1023, %v1019
  %v1025 = vpop.permute.xlu0 %1024
  %v1026 = vperm.slane %v1011, 2
  %v1027 = vlaneseq
  %v1028 = vshrl.u32 %v1027, 7
  %v1029 = vadd.s32 %v1028, 8
  %1030 = vset.pattern.permute.xlu0 %v1029
  %1031 = vperm.xlu0 %1030, %v1026
  %v1032 = vpop.permute.xlu0 %1031
  %v1033 = vperm.slane %v1011, 3
  %v1034 = vlaneseq
  %v1035 = vshrl.u32 %v1034, 7
  %v1036 = vadd.s32 %v1035, 8
  %1037 = vset.pattern.permute.xlu0 %v1036
  %1038 = vperm.xlu0 %1037, %v1033
  %v1039 = vpop.permute.xlu0 %1038
  %v1040 = vperm.slane %v1011, 4
  %v1041 = vlaneseq
  %v1042 = vshrl.u32 %v1041, 7
  %v1043 = vadd.s32 %v1042, 8
  %1044 = vset.pattern.permute.xlu0 %v1043
  %1045 = vperm.xlu0 %1044, %v1040
  %v1046 = vpop.permute.xlu0 %1045
  %v1047 = vperm.slane %v1011, 5
  %v1048 = vlaneseq
  %v1049 = vshrl.u32 %v1048, 7
  %v1050 = vadd.s32 %v1049, 8
  %1051 = vset.pattern.permute.xlu0 %v1050
  %1052 = vperm.xlu0 %1051, %v1047
  %v1053 = vpop.permute.xlu0 %1052
  %v1054 = vmul.f32 %v1005, %v1018
  %v1055 = vmul.f32 %v1006, %v1025
  %v1056 = vmul.f32 %v1007, %v1032
  %v1057 = vmul.f32 %v1008, %v1039
  %v1058 = vmul.f32 %v1009, %v1046
  %v1059 = vmul.f32 %v1010, %v1053
  %v1060 = vsel %vm61, %v1054, 0.0
  %v1061 = vrot.slane %v1060, 4
  %v1062 = vadd.f32 %v1060, %v1061
  %v1063 = vrot.slane %v1062, 2
  %v1064 = vadd.f32 %v1062, %v1063
  %v1065 = vrot.slane %v1064, 1
  %v1066 = vadd.f32 %v1064, %v1065
  %v1067 = vsel %vm61, %v1055, 0.0
  %v1068 = vrot.slane %v1067, 4
  %v1069 = vadd.f32 %v1067, %v1068
  %v1070 = vrot.slane %v1069, 2
  %v1071 = vadd.f32 %v1069, %v1070
  %v1072 = vrot.slane %v1071, 1
  %v1073 = vadd.f32 %v1071, %v1072
  %v1074 = vsel %vm61, %v1056, 0.0
  %v1075 = vrot.slane %v1074, 4
  %v1076 = vadd.f32 %v1074, %v1075
  %v1077 = vrot.slane %v1076, 2
  %v1078 = vadd.f32 %v1076, %v1077
  %v1079 = vrot.slane %v1078, 1
  %v1080 = vadd.f32 %v1078, %v1079
  %v1081 = vsel %vm61, %v1057, 0.0
  %v1082 = vrot.slane %v1081, 4
  %v1083 = vadd.f32 %v1081, %v1082
  %v1084 = vrot.slane %v1083, 2
  %v1085 = vadd.f32 %v1083, %v1084
  %v1086 = vrot.slane %v1085, 1
  %v1087 = vadd.f32 %v1085, %v1086
  %v1088 = vsel %vm61, %v1058, 0.0
  %v1089 = vrot.slane %v1088, 4
  %v1090 = vadd.f32 %v1088, %v1089
  %v1091 = vrot.slane %v1090, 2
  %v1092 = vadd.f32 %v1090, %v1091
  %v1093 = vrot.slane %v1092, 1
  %v1094 = vadd.f32 %v1092, %v1093
  %v1095 = vsel %vm61, %v1059, 0.0
  %v1096 = vrot.slane %v1095, 4
  %v1097 = vadd.f32 %v1095, %v1096
  %v1098 = vrot.slane %v1097, 2
  %v1099 = vadd.f32 %v1097, %v1098
  %v1100 = vrot.slane %v1099, 1
  %v1101 = vadd.f32 %v1099, %v1100
  %v1102 = vmul.f32 %v1066, %v1066
  %v1103 = vmul.f32 %v1073, %v1073
  %v1104 = vmul.f32 %v1080, %v1080
  %v1105 = vmul.f32 %v1087, %v1087
  %v1106 = vmul.f32 %v1094, %v1094
  %v1107 = vmul.f32 %v1101, %v1101
  %vm1114 = vcmask 1041409
  %v1115 = vsel %vm1114, %v1103, %v1102
  %vm1116 = vcmask 1042434
  %v1117 = vsel %vm1116, %v1104, %v1115
  %vm1118 = vcmask 1043459
  %v1119 = vsel %vm1118, %v1105, %v1117
  %vm1120 = vcmask 1044484
  %v1121 = vsel %vm1120, %v1106, %v1119
  %vm1122 = vcmask 1045509
  %v1123 = vsel %vm1122, %v1107, %v1121
  %vm1125 = vcmask 259072
  %v1126 = vsel %vm1125, %v1123, 0.0
  %1127 = vadd.xlane.f32.xlu0 %v1126
  %v1128 = vpop.xlane.xlu0 %1127
  %v1129 = vadd.f32 %v1128, 1e-12
  %v1130 = vrsqrt.pop %v1129
  %v1131 = vmul.f32 %v1130, %v1129
  %v1132 = vmul.f32 %v1131, %v1130
  %v1133 = vmul.f32 0.5, %v1132
  %v1134 = vsub.f32 1.5, %v1133
  %v1135 = vmul.f32 %v1130, %v1134
  %vm1136 = vweird.f32 %v1129
  %vm1137 = vweird.f32 %v1130
  %vm1138 = vmor %vm1136, %vm1137
  %v1139 = vsel %vm1138, %v1130, %v1135
  %v1141 = vrot.slane %v1139, 1
  %v1142 = vrot.slane %v1139, 2
  %v1143 = vrot.slane %v1139, 3
  %v1144 = vrot.slane %v1139, 4
  %v1145 = vrot.slane %v1139, 5
  %v1152 = vmul.f32 %v1066, %v1139
  %v1153 = vmul.f32 %v1073, %v1141
  %v1154 = vmul.f32 %v1080, %v1142
  %v1155 = vmul.f32 %v1087, %v1143
  %v1156 = vmul.f32 %v1094, %v1144
  %v1157 = vmul.f32 %v1101, %v1145
  %v1160 = vrot.slane %v1153, 7
  %v1161 = vsel %vm1114, %v1160, %v1152
  %v1166 = vrot.slane %v1155, 7
  %v1167 = vsel %vm1114, %v1166, %v1154
  %v1168 = vrot.slane %v1156, 6
  %v1169 = vsel %vm1116, %v1168, %v1167
  %v1170 = vrot.slane %v1157, 5
  %v1171 = vsel %vm1118, %v1170, %v1169
  %v1172 = vsel %vm61, %v1161, 0
  %v1174 = vsel %vm61, %v1171, 0
  %1176 = vmatpush.xpose.msra.mxu0 0.0
  %1177 = vmatpush.xpose.msra.mxu0 0.0
  %1178 = vmatpush.xpose.msra.mxu0 0.0
  %1179 = vmatpush.xpose.msra.mxu0 0.0
  %1180 = vmatpush.xpose.msra.mxu0 0.0
  %1181 = vmatpush.xpose.msra.mxu0 0.0
  %1182 = vmatpush.xpose.msra.mxu0 0.0
  %1183 = vmatpush.xpose.msra.mxu0 0.0
  %1184 = vmatpush.xpose.msra.mxu0 0.0
  %1185 = vmatpush.xpose.msra.mxu0 0.0
  %1186 = vmatpush.xpose.msra.mxu0 0.0
  %1187 = vmatpush.xpose.msra.mxu0 0.0
  %1188 = vmatpush.xpose.msra.mxu0 0.0
  %1189 = vmatpush.xpose.msra.mxu0 0.0
  %1190 = vmatpush.xpose.msra.mxu0 0.0
  %1191 = vmatpush.xpose.msra.mxu0 %v1174
  %1192 = vmatmul.f32.gmra.mxu0 %v1172
  %v1193 = vpop.f32.mrf.mxu0
  %v1194 = vadd.f32 0.0, %v1193
  %1195 = vdwg.mxu0
  %v1196 = vrcp.pop 0.05
  %v1197 = vmul.f32 0.05, %v1196
  %v1198 = vsub.f32 1.0, %v1197
  %v1199 = vmul.f32 %v1196, %v1198
  %v1200 = vadd.f32 %v1196, %v1199
  %vm1201 = vweird.f32 %v1196
  %v1202 = vsel %vm1201, %v1196, %v1200
  %v1203 = vmul.f32 %v1194, %v1202
  %vm1204 = vcmask 25600
  %v1205 = vsel %vm1204, %v1203, -inf
  %1206 = vmax.xlane.f32.xlu0 %v1205
  %v1207 = vpop.xlane.xlu0 %1206
  %v1208 = vsub.f32 %v1203, %v1207
  %v1209 = vmul.f32 %v1208, 1.442695
  %v1210 = vpow.pop %v1209
  %v1211 = vsel %vm1204, %v1210, 0.0
  %1212 = vadd.xlane.f32.xlu0 %v1211
  %v1213 = vpop.xlane.xlu0 %1212
  %v1214 = vlog2.pop %v1213
  %v1215 = vmul.f32 %v1214, 0.6931472
  %v1216 = vadd.f32 %v1215, %v1207
  %v1217 = vlaneseq
  %v1218 = vand.u32 %v1217, 127
  %v1219 = vlaneseq
  %v1220 = vshrl.u32 %v1219, 7
  %v1221 = vmul.u32 %v1220, 2
  %vm1222 = vcmp.eq.s32.totalorder %v1218, %v1221
  %v1223 = vsel %vm1222, %v1203, 0.0
  %v1224 = vsel %vm1204, %v1223, 0.0
  %1225 = vadd.xlane.f32.xlu0 %v1224
  %v1226 = vpop.xlane.xlu0 %1225
  %v1227 = vsub.f32 %v1216, %v1226
  %vm1228 = vcmask 1041408
  %v1229 = vsel %vm1228, %v1227, 0.0
  %v1230 = vrot.slane %v1229, 4
  %v1231 = vadd.f32 %v1229, %v1230
  %v1232 = vrot.slane %v1231, 2
  %v1233 = vadd.f32 %v1231, %v1232
  %v1234 = vrot.slane %v1233, 1
  %v1235 = vadd.f32 %v1233, %v1234
  %v1236 = vmul.f32 %v1235, 0.5
  %v1237 = vrot.slane %v1154, 6
  %v1238 = vsel %vm1116, %v1237, %v1161
  %v1239 = vrot.slane %v1155, 5
  %v1240 = vsel %vm1118, %v1239, %v1238
  %v1241 = vrot.slane %v1156, 4
  %v1242 = vsel %vm1120, %v1241, %v1240
  %v1243 = vrot.slane %v1157, 3
  %v1244 = vsel %vm1122, %v1243, %v1242
  %v1246 = vsel %vm61, %v1244, 0.0
  %vm1247 = vcmask 31744
  %v1248 = vsel %vm1247, %v1203, 0.0
  %vm1249 = vcmask 1045504
  %v1250 = vsel %vm1249, %v1246, 0.0
  %v1251 = vsel %vm1228, %v1248, %v1236
  %vm1252 = vcmask 1042432
  %v1253 = vsel %vm1252, %v1251, 0.0
  %1254 = vst [vmem:[%s4] sm:$0xff] %v1250
  %1255 = vst [vmem:[%s4 + $0x8] sm:$0xff] %v1253
  // Predicated region
  $region18: #{bi_encoder_forward.1} parent=0 // pred_check
    _
  $region19: #{bi_encoder_forward.1} parent=0 // pred_check_branch
    %1257 = sbr.rel (0) target = $region21
  $region20: #{bi_encoder_forward.1} parent=0 // pred_region
    _
  $region21: #{bi_encoder_forward.1} parent=0 // pred_fallthru
    _
  // Predicated region
  $region22: #{bi_encoder_forward.1} parent=0 // pred_check
    _
  $region23: #{bi_encoder_forward.1} parent=0 // pred_check_branch
    %1259 = sbr.rel (0) target = $region25
  $region24: #{bi_encoder_forward.1} parent=0 // pred_region
    _
  $region25: #{bi_encoder_forward.1} parent=0 // pred_fallthru
    _

</llo_original>
